<compile_context>
chip_gen: v5e
topology: v5e:2x2
jax: 0.10.0
libtpu: 0.0.40
codegen_flags: <defaults>
</compile_context>

<pallas_src>
import functools
import math

import jax
import jax.numpy as jnp
from jax.experimental import pallas as pl
from jax.experimental.pallas import tpu as pltpu


# ------------------------------ tiling helpers --------------------------------

def _tile(dim, preferred, align):
    """Largest multiple of `align` that divides `dim` and is <= preferred,
    else the full dim (full-extent blocks are always legal)."""
    if dim <= preferred:
        return dim
    t = (preferred // align) * align
    while t >= align:
        if dim % t == 0:
            return t
        t -= align
    return dim


_RESIDENT_VMEM_BUDGET = 26 * 1024 * 1024   # conservative vs v7x 32 MiB scoped default
_DENSE_VMEM_LIMIT = 32 * 1024 * 1024


def _pick_resident_tm(M, K, N):
    """Row tile for the weight-resident dense path, or None if the weight
    cannot be kept VMEM-resident within budget."""
    for pref in (512, 256, 128, 64, 32, 16):
        tm = _tile(M, pref, 16)            # 16-row align: bf16 sublane packing
        est = (2 * K * N * 2               # resident bf16 weight (2 pipeline bufs)
               + 2 * tm * K * 2            # activation input blocks
               + 2 * tm * N * 2            # bf16 output blocks
               + tm * N * 4                # f32 matmul result / epilogue temp
               + 2 * N * 4)                # bias
        if est <= _RESIDENT_VMEM_BUDGET:
            return tm
    return None


def _head_group(num_heads, head_dim):
    """Number of heads processed together so each group spans ~128 lanes."""
    if head_dim >= 128:
        return 1
    group = max(1, min(num_heads, 128 // head_dim))
    while num_heads % group:
        group -= 1
    return group


# ----------------------------- Pallas kernels --------------------------------

def _dense_resident_kernel(x_ref, w_ref, b_ref, o_ref, *, act):
    # Full (K, N) weight resident in VMEM; one MXU pass per row tile.
    y = jnp.dot(x_ref[...], w_ref[...], preferred_element_type=jnp.float32)
    y = y + b_ref[...]
    if act == "gelu":
        # TODO(synk): HF BERT uses exact erf-GELU; tanh approximation here.
        y = jax.nn.gelu(y, approximate=True)
    o_ref[...] = y.astype(o_ref.dtype)


def _dense_tiled_kernel(x_ref, w_ref, b_ref, o_ref, acc_ref, *, act):
    @pl.when(pl.program_id(2) == 0)
    def _():
        acc_ref[...] = jnp.zeros_like(acc_ref)

    acc_ref[...] += jnp.dot(x_ref[...], w_ref[...],
                            preferred_element_type=jnp.float32)

    @pl.when(pl.program_id(2) == pl.num_programs(2) - 1)
    def _():
        y = acc_ref[...] + b_ref[...]
        if act == "gelu":
            # TODO(synk): HF BERT uses exact erf-GELU; tanh approximation here.
            y = jax.nn.gelu(y, approximate=True)
        o_ref[...] = y.astype(o_ref.dtype)


def dense(x, w, b, act=None):
    """x: (M, K) bf16, w: (K, N) bf16, b: (N,) f32 -> (M, N) bf16."""
    M, K = x.shape
    N = w.shape[1]
    b2d = b.reshape(1, N).astype(jnp.float32)

    tm = _pick_resident_tm(M, K, N)
    if tm is not None:
        # Weight-resident path: grid over M only.  The weight's block index is
        # constant, so it is DMA'd into VMEM once and reused for every row
        # tile -> no per-M-tile weight re-fetch from HBM.
        return pl.pallas_call(
            functools.partial(_dense_resident_kernel, act=act),
            out_shape=jax.ShapeDtypeStruct((M, N), x.dtype),
            grid=(M // tm,),
            in_specs=[
                pl.BlockSpec((tm, K), lambda i: (i, 0)),
                pl.BlockSpec((K, N), lambda i: (0, 0)),
                pl.BlockSpec((1, N), lambda i: (0, 0)),
            ],
            out_specs=pl.BlockSpec((tm, N), lambda i: (i, 0)),
            compiler_params=pltpu.CompilerParams(
                dimension_semantics=("parallel",),
                vmem_limit_bytes=_DENSE_VMEM_LIMIT),
        )(x, w, b2d)

    # Fallback: classic (i, j, k) tiling with an f32 accumulator.  256-aligned
    # K/N tiles keep v6e/v7x 256x256 MXU passes fully filled.
    tm = _tile(M, 512, 16)
    tn = _tile(N, 512, 256)
    tk = _tile(K, 512, 256)
    return pl.pallas_call(
        functools.partial(_dense_tiled_kernel, act=act),
        out_shape=jax.ShapeDtypeStruct((M, N), x.dtype),
        grid=(M // tm, N // tn, K // tk),
        in_specs=[
            pl.BlockSpec((tm, tk), lambda i, j, k: (i, k)),
            pl.BlockSpec((tk, tn), lambda i, j, k: (k, j)),
            pl.BlockSpec((1, tn), lambda i, j, k: (0, j)),
        ],
        out_specs=pl.BlockSpec((tm, tn), lambda i, j, k: (i, j)),
        scratch_shapes=[pltpu.VMEM((tm, tn), jnp.float32)],
        compiler_params=pltpu.CompilerParams(
            dimension_semantics=("parallel", "parallel", "arbitrary"),
            vmem_limit_bytes=_DENSE_VMEM_LIMIT),
    )(x, w, b2d)


def _ln_kernel(*refs, eps, residual):
    if residual:
        x_ref, r_ref, g_ref, b_ref, o_ref = refs
        x = x_ref[...].astype(jnp.float32) + r_ref[...].astype(jnp.float32)
    else:
        x_ref, g_ref, b_ref, o_ref = refs
        x = x_ref[...].astype(jnp.float32)
    mean = jnp.mean(x, axis=-1, keepdims=True)
    var = jnp.mean(jnp.square(x - mean), axis=-1, keepdims=True)
    y = (x - mean) * jax.lax.rsqrt(var + eps)
    o_ref[...] = (y * g_ref[...] + b_ref[...]).astype(o_ref.dtype)


def layernorm(x, g, b, residual=None, eps=1e-12, out_dtype=jnp.bfloat16):
    """Fused (optional residual add) + layernorm over rows of (M, H)."""
    M, H = x.shape
    tm = _tile(M, 512, 16)
    arrays = [x] + ([residual] if residual is not None else [])
    in_specs = [pl.BlockSpec((tm, H), lambda i: (i, 0))] * len(arrays)
    in_specs += [pl.BlockSpec((1, H), lambda i: (0, 0)),
                 pl.BlockSpec((1, H), lambda i: (0, 0))]
    return pl.pallas_call(
        functools.partial(_ln_kernel, eps=eps, residual=residual is not None),
        out_shape=jax.ShapeDtypeStruct((M, H), out_dtype),
        grid=(M // tm,),
        in_specs=in_specs,
        out_specs=pl.BlockSpec((tm, H), lambda i: (i, 0)),
        compiler_params=pltpu.CompilerParams(
            dimension_semantics=("parallel",)),
    )(*arrays,
      g.reshape(1, H).astype(jnp.float32),
      b.reshape(1, H).astype(jnp.float32))


def _attn_kernel(qkv_ref, m_ref, o_ref, *, group, head_dim):
    # qkv_ref: (1, S, 3*PW) bf16 for one (batch, head-group) cell, laid out as
    # [q_group | k_group | v_group] with PW = group*head_dim (~128 lanes).
    # The 1/sqrt(dh) scale is folded into the Q projection at pack time.
    PW = group * head_dim
    qkv = qkv_ref[0]                     # (S, 3*PW) in VMEM
    q = qkv[:, :PW]
    k = qkv[:, PW:2 * PW]
    v = qkv[:, 2 * PW:3 * PW]
    m = m_ref[0]                         # (1, S) additive key mask, broadcasts

    ctxs = []
    for h in range(group):               # small unrolled loop (typically 2)
        lo, hi = h * head_dim, (h + 1) * head_dim
        # QK^T without materializing a transpose: contract the last dims.
        s = jax.lax.dot_general(q[:, lo:hi], k[:, lo:hi],
                                (((1,), (1,)), ((), ())),
                                preferred_element_type=jnp.float32)   # (S, S)
        s = s + m
        s = s - jnp.max(s, axis=-1, keepdims=True)
        p = jnp.exp(s)
        p = p * pl.reciprocal(jnp.sum(p, axis=-1, keepdims=True), approx=True)
        ctxs.append(jnp.dot(p.astype(v.dtype), v[:, lo:hi],
                            preferred_element_type=jnp.float32))      # (S, dh)
    out = ctxs[0] if group == 1 else jnp.concatenate(ctxs, axis=-1)
    o_ref[0] = out.astype(o_ref.dtype)   # single lane-dense (S, PW) store


def attention(qkv, mask_add, num_heads, head_dim):
    """qkv: (B, S, 3H) bf16 in head-group-major layout; mask_add: (B, 1, S) f32
    -> (B, S, H) bf16 with heads in standard (head-major) order."""
    B, S, H3 = qkv.shape
    H = H3 // 3
    group = _head_group(num_heads, head_dim)
    PW = group * head_dim
    n_groups = num_heads // group
    return pl.pallas_call(
        functools.partial(_attn_kernel, group=group, head_dim=head_dim),
        out_shape=jax.ShapeDtypeStruct((B, S, H), qkv.dtype),
        grid=(B, n_groups),
        in_specs=[
            pl.BlockSpec((1, S, 3 * PW), lambda b, p: (b, 0, p)),
            pl.BlockSpec((1, 1, S), lambda b, p: (b, 0, 0)),
        ],
        out_specs=pl.BlockSpec((1, S, PW), lambda b, p: (b, 0, p)),
        compiler_params=pltpu.CompilerParams(
            dimension_semantics=("parallel", "parallel")),
    )(qkv, mask_add)


# ------------------------------ BERT forward ---------------------------------

def encoder_layer(x2d, mask_add, p, num_heads, head_dim, B, S):
    M, H = x2d.shape

    qkv = dense(x2d, p["wqkv"], p["bqkv"])                           # (M, 3H)
    ctx = attention(qkv.reshape(B, S, 3 * H), mask_add, num_heads, head_dim)
    attn_out = dense(ctx.reshape(M, H), p["wo"], p["bo"])            # (M, H)
    x2d = layernorm(attn_out, p["ln1_g"], p["ln1_b"], residual=x2d)

    h = dense(x2d, p["w1"], p["b1"], act="gelu")                     # (M, I)
    ffn = dense(h, p["w2"], p["b2"])                                 # (M, H)
    x2d = layernorm(ffn, p["ln2_g"], p["ln2_b"], residual=x2d)
    return x2d


def bert_cls_forward(params, input_ids, attention_mask, *, num_heads):
    B, S = input_ids.shape
    H = params["word_emb"].shape[1]
    head_dim = H // num_heads

    # Embeddings (gather + add = glue) in f32; the LayerNorm consumes the f32
    # sum and emits bf16 (matches HF embedding-LN precision).
    # TODO(synk): token_type_ids hard-coded to 0 (module is called without segment ids).
    x = params["word_emb"][input_ids]                                # (B, S, H)
    x = x + params["pos_emb"][:S][None, :, :]
    x = x + params["type_emb"][0][None, None, :]
    x2d = layernorm(x.reshape(B * S, H), params["emb_ln_g"], params["emb_ln_b"])

    # HF-style extended additive mask: 0 keep, -1e9 pad; (B, 1, S), no per-head copy.
    mask_add = ((1.0 - attention_mask.astype(jnp.float32)) * -1e9).reshape(B, 1, S)

    for layer_params in params["layers"]:
        x2d = encoder_layer(x2d, mask_add, layer_params, num_heads, head_dim, B, S)

    # BioClinicalBERT_FT.forward returns last_hidden_state[:, 0, :]
    return x2d.reshape(B, S, H)[:, 0, :].astype(jnp.float32)


# ----------------------------- parameter setup --------------------------------

def init_params(key, *, vocab, hidden, inter, layers, max_pos, type_vocab):
    """HF-style parameters (separate Q/K/V, f32) representing the wrapped model."""
    keys = jax.random.split(key, 3 + layers)
    std = 0.02

    def norm(k, shape):
        return jax.random.normal(k, shape, jnp.float32) * std

    params = {
        "word_emb": norm(keys[0], (vocab, hidden)),
        "pos_emb": norm(keys[1], (max_pos, hidden)),
        "type_emb": norm(keys[2], (type_vocab, hidden)),
        "emb_ln_g": jnp.ones((hidden,), jnp.float32),
        "emb_ln_b": jnp.zeros((hidden,), jnp.float32),
        "layers": [],
    }
    for li in range(layers):
        lk = jax.random.split(keys[3 + li], 6)
        params["layers"].append({
            "wq": norm(lk[0], (hidden, hidden)), "bq": jnp.zeros((hidden,), jnp.float32),
            "wk": norm(lk[1], (hidden, hidden)), "bk": jnp.zeros((hidden,), jnp.float32),
            "wv": norm(lk[2], (hidden, hidden)), "bv": jnp.zeros((hidden,), jnp.float32),
            "wo": norm(lk[3], (hidden, hidden)), "bo": jnp.zeros((hidden,), jnp.float32),
            "ln1_g": jnp.ones((hidden,), jnp.float32),
            "ln1_b": jnp.zeros((hidden,), jnp.float32),
            "w1": norm(lk[4], (hidden, inter)), "b1": jnp.zeros((inter,), jnp.float32),
            "w2": norm(lk[5], (inter, hidden)), "b2": jnp.zeros((hidden,), jnp.float32),
            "ln2_g": jnp.ones((hidden,), jnp.float32),
            "ln2_b": jnp.zeros((hidden,), jnp.float32),
        })
    return params


def pack_params(params, num_heads):
    """One-time (outside jit) repack into the kernel-friendly layout:
      * Q/K/V fused into one (H, 3H) weight whose columns are head-group-major
        ([q_g0 | k_g0 | v_g0 | q_g1 | ...]) so per-group attention slices and
        stores are contiguous ~128-lane blocks.
      * 1/sqrt(dh) folded into the Q projection (no per-score VPU multiply).
      * Matmul weights cast to bf16; biases / LN params stay f32.
    """
    hidden = params["word_emb"].shape[1]
    head_dim = hidden // num_heads
    group = _head_group(num_heads, head_dim)
    PW = group * head_dim
    scale = 1.0 / math.sqrt(head_dim)

    packed = {k: v for k, v in params.items() if k != "layers"}
    packed["layers"] = []
    for p in params["layers"]:
        wq, bq = p["wq"] * scale, p["bq"] * scale
        wk, bk, wv, bv = p["wk"], p["bk"], p["wv"], p["bv"]
        wcols, bcols = [], []
        for g in range(num_heads // group):
            sl = slice(g * PW, (g + 1) * PW)
            wcols += [wq[:, sl], wk[:, sl], wv[:, sl]]
            bcols += [bq[sl], bk[sl], bv[sl]]
        packed["layers"].append({
            "wqkv": jnp.concatenate(wcols, axis=1).astype(jnp.bfloat16),
            "bqkv": jnp.concatenate(bcols).astype(jnp.float32),
            "wo": p["wo"].astype(jnp.bfloat16), "bo": p["bo"],
            "ln1_g": p["ln1_g"], "ln1_b": p["ln1_b"],
            "w1": p["w1"].astype(jnp.bfloat16), "b1": p["b1"],
            "w2": p["w2"].astype(jnp.bfloat16), "b2": p["b2"],
            "ln2_g": p["ln2_g"], "ln2_b": p["ln2_b"],
        })
    return packed


# ---------------------------------- main ---------------------------------------

if __name__ == "__main__":
    # Small synthetic BERT config.
    B, S = 2, 8
    HIDDEN, HEADS, INTER, LAYERS = 32, 2, 64, 2
    VOCAB, MAX_POS, TYPE_VOCAB = 128, 16, 2

    key = jax.random.PRNGKey(0)
    k_params, k_ids = jax.random.split(key)

    params = init_params(k_params, vocab=VOCAB, hidden=HIDDEN, inter=INTER,
                         layers=LAYERS, max_pos=MAX_POS, type_vocab=TYPE_VOCAB)
    packed = pack_params(params, num_heads=HEADS)

    input_ids = jax.random.randint(k_ids, (B, S), 0, VOCAB, dtype=jnp.int32)
    attention_mask = jnp.array([[1, 1, 1, 1, 1, 1, 1, 1],
                                [1, 1, 1, 1, 1, 1, 0, 0]], dtype=jnp.int32)

    fwd = jax.jit(functools.partial(bert_cls_forward, num_heads=HEADS))
    cls_emb = fwd(packed, input_ids, attention_mask)
    cls_emb = jax.block_until_ready(cls_emb)

    assert cls_emb.shape == (B, HIDDEN), cls_emb.shape
    assert bool(jnp.all(jnp.isfinite(cls_emb)))
    print("KERNEL_OK")
</pallas_src>

<mosaic_0001>
module attributes {stable_mosaic.version = 11 : i64} {
  func.func @_ln_kernel(%arg0: i32, %arg1: memref<16x32xf32, #tpu.memory_space<vmem>>, %arg2: memref<1x32xf32, #tpu.memory_space<vmem>>, %arg3: memref<1x32xf32, #tpu.memory_space<vmem>>, %arg4: memref<16x32xbf16, #tpu.memory_space<vmem>>) attributes {dimension_semantics = [#tpu.dimension_semantics<parallel>], iteration_bounds = array<i64: 1>, scalar_prefetch = 0 : i64, scratch_operands = 0 : i64, tpu.core_type = #tpu.core_type<tc>, window_params = [{transform_indices = @transform_0, window_bounds = array<i64: 16, 32>}, {pipeline_mode = #tpu.pipeline_mode<synchronous>, transform_indices = @transform_1, window_bounds = array<i64: 1, 32>}, {pipeline_mode = #tpu.pipeline_mode<synchronous>, transform_indices = @transform_2, window_bounds = array<i64: 1, 32>}, {transform_indices = @transform_3, window_bounds = array<i64: 16, 32>}]} {
    %c0 = arith.constant 0 : index
    %c0_0 = arith.constant 0 : index
    %0 = vector.load %arg1[%c0, %c0_0] : memref<16x32xf32, #tpu.memory_space<vmem>>, vector<16x32xf32>
    %cst = arith.constant dense<0.000000e+00> : vector<16xf32>
    %1 = vector.multi_reduction <add>, %0, %cst [1] : vector<16x32xf32> to vector<16xf32>
    %2 = vector.shape_cast %1 : vector<16xf32> to vector<16x1xf32>
    %cst_1 = arith.constant 3.200000e+01 : f32
    %3 = vector.broadcast %cst_1 : f32 to vector<16x1xf32>
    %4 = arith.divf %2, %3 : vector<16x1xf32>
    %5 = vector.broadcast %4 : vector<16x1xf32> to vector<16x32xf32>
    %6 = arith.subf %0, %5 : vector<16x32xf32>
    %7 = arith.mulf %6, %6 : vector<16x32xf32>
    %cst_2 = arith.constant dense<0.000000e+00> : vector<16xf32>
    %8 = vector.multi_reduction <add>, %7, %cst_2 [1] : vector<16x32xf32> to vector<16xf32>
    %9 = vector.shape_cast %8 : vector<16xf32> to vector<16x1xf32>
    %cst_3 = arith.constant 3.200000e+01 : f32
    %10 = vector.broadcast %cst_3 : f32 to vector<16x1xf32>
    %11 = arith.divf %9, %10 : vector<16x1xf32>
    %12 = vector.broadcast %4 : vector<16x1xf32> to vector<16x32xf32>
    %13 = arith.subf %0, %12 : vector<16x32xf32>
    %cst_4 = arith.constant 9.99999996E-13 : f32
    %14 = vector.broadcast %cst_4 : f32 to vector<16x1xf32>
    %15 = arith.addf %11, %14 : vector<16x1xf32>
    %16 = math.rsqrt %15 : vector<16x1xf32>
    %17 = vector.broadcast %16 : vector<16x1xf32> to vector<16x32xf32>
    %18 = arith.mulf %13, %17 : vector<16x32xf32>
    %c0_5 = arith.constant 0 : index
    %c0_6 = arith.constant 0 : index
    %19 = vector.load %arg2[%c0_5, %c0_6] : memref<1x32xf32, #tpu.memory_space<vmem>>, vector<1x32xf32>
    %20 = vector.broadcast %19 : vector<1x32xf32> to vector<16x32xf32>
    %21 = arith.mulf %18, %20 : vector<16x32xf32>
    %c0_7 = arith.constant 0 : index
    %c0_8 = arith.constant 0 : index
    %22 = vector.load %arg3[%c0_7, %c0_8] : memref<1x32xf32, #tpu.memory_space<vmem>>, vector<1x32xf32>
    %23 = vector.broadcast %22 : vector<1x32xf32> to vector<16x32xf32>
    %24 = arith.addf %21, %23 : vector<16x32xf32>
    %25 = arith.truncf %24 : vector<16x32xf32> to vector<16x32xbf16>
    %c0_9 = arith.constant 0 : index
    %c0_10 = arith.constant 0 : index
    %26 = vector.load %arg4[%c0_9, %c0_10] : memref<16x32xbf16, #tpu.memory_space<vmem>>, vector<16x32xbf16>
    tpu.vector_store %arg4[%c0_9, %c0_10], %25 {strides = array<i32>} : memref<16x32xbf16, #tpu.memory_space<vmem>>, vector<16x32xbf16>,
    return
  }
  func.func @transform_0(%arg0: i32) -> (i32, i32) {
    %c0_i32 = arith.constant 0 : i32
    %c0_i32_0 = arith.constant 0 : i32
    return %arg0, %c0_i32 : i32, i32
  }
  func.func @transform_1(%arg0: i32) -> (i32, i32) {
    %c0_i32 = arith.constant 0 : i32
    %c0_i32_0 = arith.constant 0 : i32
    %c0_i32_1 = arith.constant 0 : i32
    return %c0_i32, %c0_i32_0 : i32, i32
  }
  func.func @transform_2(%arg0: i32) -> (i32, i32) {
    %c0_i32 = arith.constant 0 : i32
    %c0_i32_0 = arith.constant 0 : i32
    %c0_i32_1 = arith.constant 0 : i32
    return %c0_i32, %c0_i32_0 : i32, i32
  }
  func.func @transform_3(%arg0: i32) -> (i32, i32) {
    %c0_i32 = arith.constant 0 : i32
    %c0_i32_0 = arith.constant 0 : i32
    return %arg0, %c0_i32 : i32, i32
  }
}

module attributes {stable_mosaic.version = 11 : i64} {
  func.func @_dense_resident_kernel(%arg0: i32, %arg1: memref<16x32xbf16, #tpu.memory_space<vmem>>, %arg2: memref<32x96xbf16, #tpu.memory_space<vmem>>, %arg3: memref<1x96xf32, #tpu.memory_space<vmem>>, %arg4: memref<16x96xbf16, #tpu.memory_space<vmem>>) attributes {dimension_semantics = [#tpu.dimension_semantics<parallel>], iteration_bounds = array<i64: 1>, scalar_prefetch = 0 : i64, scratch_operands = 0 : i64, tpu.core_type = #tpu.core_type<tc>, window_params = [{transform_indices = @transform_0, window_bounds = array<i64: 16, 32>}, {pipeline_mode = #tpu.pipeline_mode<synchronous>, transform_indices = @transform_1, window_bounds = array<i64: 32, 96>}, {pipeline_mode = #tpu.pipeline_mode<synchronous>, transform_indices = @transform_2, window_bounds = array<i64: 1, 96>}, {transform_indices = @transform_3, window_bounds = array<i64: 16, 96>}]} {
    %c0 = arith.constant 0 : index
    %c0_0 = arith.constant 0 : index
    %0 = vector.load %arg1[%c0, %c0_0] : memref<16x32xbf16, #tpu.memory_space<vmem>>, vector<16x32xbf16>
    %c0_1 = arith.constant 0 : index
    %c0_2 = arith.constant 0 : index
    %1 = vector.load %arg2[%c0_1, %c0_2] : memref<32x96xbf16, #tpu.memory_space<vmem>>, vector<32x96xbf16>
    %cst = arith.constant dense<0.000000e+00> : vector<16x96xf32>
    %2 = tpu.matmul %0, %1, %cst {dimension_numbers = #tpu.dot_dimension_numbers<[1], [0], [0], [1], [0, 0, 1, 1], [], []>} : vector<16x32xbf16>, vector<32x96xbf16>, vector<16x96xf32> -> vector<16x96xf32>
    %c0_3 = arith.constant 0 : index
    %c0_4 = arith.constant 0 : index
    %3 = vector.load %arg3[%c0_3, %c0_4] : memref<1x96xf32, #tpu.memory_space<vmem>>, vector<1x96xf32>
    %4 = vector.broadcast %3 : vector<1x96xf32> to vector<16x96xf32>
    %5 = arith.addf %2, %4 : vector<16x96xf32>
    %6 = arith.truncf %5 : vector<16x96xf32> to vector<16x96xbf16>
    %c0_5 = arith.constant 0 : index
    %c0_6 = arith.constant 0 : index
    %7 = vector.load %arg4[%c0_5, %c0_6] : memref<16x96xbf16, #tpu.memory_space<vmem>>, vector<16x96xbf16>
    tpu.vector_store %arg4[%c0_5, %c0_6], %6 {strides = array<i32>} : memref<16x96xbf16, #tpu.memory_space<vmem>>, vector<16x96xbf16>,
    return
  }
  func.func @transform_0(%arg0: i32) -> (i32, i32) {
    %c0_i32 = arith.constant 0 : i32
    %c0_i32_0 = arith.constant 0 : i32
    return %arg0, %c0_i32 : i32, i32
  }
  func.func @transform_1(%arg0: i32) -> (i32, i32) {
    %c0_i32 = arith.constant 0 : i32
    %c0_i32_0 = arith.constant 0 : i32
    %c0_i32_1 = arith.constant 0 : i32
    return %c0_i32, %c0_i32_0 : i32, i32
  }
  func.func @transform_2(%arg0: i32) -> (i32, i32) {
    %c0_i32 = arith.constant 0 : i32
    %c0_i32_0 = arith.constant 0 : i32
    %c0_i32_1 = arith.constant 0 : i32
    return %c0_i32, %c0_i32_0 : i32, i32
  }
  func.func @transform_3(%arg0: i32) -> (i32, i32) {
    %c0_i32 = arith.constant 0 : i32
    %c0_i32_0 = arith.constant 0 : i32
    return %arg0, %c0_i32 : i32, i32
  }
}

module attributes {stable_mosaic.version = 11 : i64} {
  func.func @_attn_kernel(%arg0: i32, %arg1: i32, %arg2: memref<1x8x96xbf16, #tpu.memory_space<vmem>>, %arg3: memref<1x1x8xf32, #tpu.memory_space<vmem>>, %arg4: memref<1x8x32xbf16, #tpu.memory_space<vmem>>) attributes {dimension_semantics = [#tpu.dimension_semantics<parallel>, #tpu.dimension_semantics<parallel>], iteration_bounds = array<i64: 2, 1>, scalar_prefetch = 0 : i64, scratch_operands = 0 : i64, tpu.core_type = #tpu.core_type<tc>, window_params = [{transform_indices = @transform_0, window_bounds = array<i64: 1, 8, 96>}, {transform_indices = @transform_1, window_bounds = array<i64: 1, 1, 8>}, {transform_indices = @transform_2, window_bounds = array<i64: 1, 8, 32>}]} {
    %c0 = arith.constant 0 : index
    %c0_0 = arith.constant 0 : index
    %c0_1 = arith.constant 0 : index
    %0 = vector.load %arg2[%c0, %c0_0, %c0_1] : memref<1x8x96xbf16, #tpu.memory_space<vmem>>, vector<1x8x96xbf16>
    %1 = vector.shape_cast %0 : vector<1x8x96xbf16> to vector<8x96xbf16>
    %2 = vector.extract_strided_slice %1 {offsets = [0, 0], sizes = [8, 32], strides = [1, 1]} : vector<8x96xbf16> to vector<8x32xbf16>
    %3 = vector.extract_strided_slice %1 {offsets = [0, 32], sizes = [8, 32], strides = [1, 1]} : vector<8x96xbf16> to vector<8x32xbf16>
    %4 = vector.extract_strided_slice %1 {offsets = [0, 64], sizes = [8, 32], strides = [1, 1]} : vector<8x96xbf16> to vector<8x32xbf16>
    %c0_2 = arith.constant 0 : index
    %c0_3 = arith.constant 0 : index
    %c0_4 = arith.constant 0 : index
    %5 = vector.load %arg3[%c0_2, %c0_3, %c0_4] : memref<1x1x8xf32, #tpu.memory_space<vmem>>, vector<1x1x8xf32>
    %6 = vector.shape_cast %5 : vector<1x1x8xf32> to vector<1x8xf32>
    %7 = vector.extract_strided_slice %2 {offsets = [0, 0], sizes = [8, 16], strides = [1, 1]} : vector<8x32xbf16> to vector<8x16xbf16>
    %8 = vector.extract_strided_slice %3 {offsets = [0, 0], sizes = [8, 16], strides = [1, 1]} : vector<8x32xbf16> to vector<8x16xbf16>
    %cst = arith.constant dense<0.000000e+00> : vector<8x8xf32>
    %9 = tpu.matmul %7, %8, %cst {dimension_numbers = #tpu.dot_dimension_numbers<[1], [1], [0], [0], [0, 0, 1, 0], [], []>} : vector<8x16xbf16>, vector<8x16xbf16>, vector<8x8xf32> -> vector<8x8xf32>
    %10 = vector.broadcast %6 : vector<1x8xf32> to vector<8x8xf32>
    %11 = arith.addf %9, %10 : vector<8x8xf32>
    %cst_5 = arith.constant dense<0xFF800000> : vector<8xf32>
    %12 = vector.multi_reduction <maximumf>, %11, %cst_5 [1] : vector<8x8xf32> to vector<8xf32>
    %13 = vector.shape_cast %12 : vector<8xf32> to vector<8x1xf32>
    %14 = vector.broadcast %13 : vector<8x1xf32> to vector<8x8xf32>
    %15 = arith.subf %11, %14 : vector<8x8xf32>
    %16 = math.exp %15 : vector<8x8xf32>
    %cst_6 = arith.constant dense<0.000000e+00> : vector<8xf32>
    %17 = vector.multi_reduction <add>, %16, %cst_6 [1] : vector<8x8xf32> to vector<8xf32>
    %18 = vector.shape_cast %17 : vector<8xf32> to vector<8x1xf32>
    %19 = tpu.reciprocal %18 {approx = true} : vector<8x1xf32> -> vector<8x1xf32>
    %20 = vector.broadcast %19 : vector<8x1xf32> to vector<8x8xf32>
    %21 = arith.mulf %16, %20 : vector<8x8xf32>
    %22 = arith.truncf %21 : vector<8x8xf32> to vector<8x8xbf16>
    %23 = vector.extract_strided_slice %4 {offsets = [0, 0], sizes = [8, 16], strides = [1, 1]} : vector<8x32xbf16> to vector<8x16xbf16>
    %cst_7 = arith.constant dense<0.000000e+00> : vector<8x16xf32>
    %24 = tpu.matmul %22, %23, %cst_7 {dimension_numbers = #tpu.dot_dimension_numbers<[1], [0], [0], [1], [0, 0, 1, 1], [], []>} : vector<8x8xbf16>, vector<8x16xbf16>, vector<8x16xf32> -> vector<8x16xf32>
    %25 = vector.extract_strided_slice %2 {offsets = [0, 16], sizes = [8, 16], strides = [1, 1]} : vector<8x32xbf16> to vector<8x16xbf16>
    %26 = vector.extract_strided_slice %3 {offsets = [0, 16], sizes = [8, 16], strides = [1, 1]} : vector<8x32xbf16> to vector<8x16xbf16>
    %cst_8 = arith.constant dense<0.000000e+00> : vector<8x8xf32>
    %27 = tpu.matmul %25, %26, %cst_8 {dimension_numbers = #tpu.dot_dimension_numbers<[1], [1], [0], [0], [0, 0, 1, 0], [], []>} : vector<8x16xbf16>, vector<8x16xbf16>, vector<8x8xf32> -> vector<8x8xf32>
    %28 = vector.broadcast %6 : vector<1x8xf32> to vector<8x8xf32>
    %29 = arith.addf %27, %28 : vector<8x8xf32>
    %cst_9 = arith.constant dense<0xFF800000> : vector<8xf32>
    %30 = vector.multi_reduction <maximumf>, %29, %cst_9 [1] : vector<8x8xf32> to vector<8xf32>
    %31 = vector.shape_cast %30 : vector<8xf32> to vector<8x1xf32>
    %32 = vector.broadcast %31 : vector<8x1xf32> to vector<8x8xf32>
    %33 = arith.subf %29, %32 : vector<8x8xf32>
    %34 = math.exp %33 : vector<8x8xf32>
    %cst_10 = arith.constant dense<0.000000e+00> : vector<8xf32>
    %35 = vector.multi_reduction <add>, %34, %cst_10 [1] : vector<8x8xf32> to vector<8xf32>
    %36 = vector.shape_cast %35 : vector<8xf32> to vector<8x1xf32>
    %37 = tpu.reciprocal %36 {approx = true} : vector<8x1xf32> -> vector<8x1xf32>
    %38 = vector.broadcast %37 : vector<8x1xf32> to vector<8x8xf32>
    %39 = arith.mulf %34, %38 : vector<8x8xf32>
    %40 = arith.truncf %39 : vector<8x8xf32> to vector<8x8xbf16>
    %41 = vector.extract_strided_slice %4 {offsets = [0, 16], sizes = [8, 16], strides = [1, 1]} : vector<8x32xbf16> to vector<8x16xbf16>
    %cst_11 = arith.constant dense<0.000000e+00> : vector<8x16xf32>
    %42 = tpu.matmul %40, %41, %cst_11 {dimension_numbers = #tpu.dot_dimension_numbers<[1], [0], [0], [1], [0, 0, 1, 1], [], []>} : vector<8x8xbf16>, vector<8x16xbf16>, vector<8x16xf32> -> vector<8x16xf32>
    %43 = tpu.concatenate %24, %42 in 1 : vector<8x16xf32>, vector<8x16xf32> -> vector<8x32xf32>
    %44 = arith.truncf %43 : vector<8x32xf32> to vector<8x32xbf16>
    %c0_12 = arith.constant 0 : index
    %c0_13 = arith.constant 0 : index
    %c0_14 = arith.constant 0 : index
    %45 = vector.load %arg4[%c0_12, %c0_13, %c0_14] : memref<1x8x32xbf16, #tpu.memory_space<vmem>>, vector<1x8x32xbf16>
    %46 = vector.shape_cast %45 : vector<1x8x32xbf16> to vector<8x32xbf16>
    %47 = vector.shape_cast %44 : vector<8x32xbf16> to vector<1x8x32xbf16>
    tpu.vector_store %arg4[%c0_12, %c0_13, %c0_14], %47 {strides = array<i32>} : memref<1x8x32xbf16, #tpu.memory_space<vmem>>, vector<1x8x32xbf16>,
    return
  }
  func.func @transform_0(%arg0: i32, %arg1: i32) -> (i32, i32, i32) {
    %c0_i32 = arith.constant 0 : i32
    %c0_i32_0 = arith.constant 0 : i32
    return %arg0, %c0_i32, %arg1 : i32, i32, i32
  }
  func.func @transform_1(%arg0: i32, %arg1: i32) -> (i32, i32, i32) {
    %c0_i32 = arith.constant 0 : i32
    %c0_i32_0 = arith.constant 0 : i32
    %c0_i32_1 = arith.constant 0 : i32
    return %arg0, %c0_i32, %c0_i32_0 : i32, i32, i32
  }
  func.func @transform_2(%arg0: i32, %arg1: i32) -> (i32, i32, i32) {
    %c0_i32 = arith.constant 0 : i32
    %c0_i32_0 = arith.constant 0 : i32
    return %arg0, %c0_i32, %arg1 : i32, i32, i32
  }
}

module attributes {stable_mosaic.version = 11 : i64} {
  func.func @_dense_resident_kernel(%arg0: i32, %arg1: memref<16x32xbf16, #tpu.memory_space<vmem>>, %arg2: memref<32x32xbf16, #tpu.memory_space<vmem>>, %arg3: memref<1x32xf32, #tpu.memory_space<vmem>>, %arg4: memref<16x32xbf16, #tpu.memory_space<vmem>>) attributes {dimension_semantics = [#tpu.dimension_semantics<parallel>], iteration_bounds = array<i64: 1>, scalar_prefetch = 0 : i64, scratch_operands = 0 : i64, tpu.core_type = #tpu.core_type<tc>, window_params = [{transform_indices = @transform_0, window_bounds = array<i64: 16, 32>}, {pipeline_mode = #tpu.pipeline_mode<synchronous>, transform_indices = @transform_1, window_bounds = array<i64: 32, 32>}, {pipeline_mode = #tpu.pipeline_mode<synchronous>, transform_indices = @transform_2, window_bounds = array<i64: 1, 32>}, {transform_indices = @transform_3, window_bounds = array<i64: 16, 32>}]} {
    %c0 = arith.constant 0 : index
    %c0_0 = arith.constant 0 : index
    %0 = vector.load %arg1[%c0, %c0_0] : memref<16x32xbf16, #tpu.memory_space<vmem>>, vector<16x32xbf16>
    %c0_1 = arith.constant 0 : index
    %c0_2 = arith.constant 0 : index
    %1 = vector.load %arg2[%c0_1, %c0_2] : memref<32x32xbf16, #tpu.memory_space<vmem>>, vector<32x32xbf16>
    %cst = arith.constant dense<0.000000e+00> : vector<16x32xf32>
    %2 = tpu.matmul %0, %1, %cst {dimension_numbers = #tpu.dot_dimension_numbers<[1], [0], [0], [1], [0, 0, 1, 1], [], []>} : vector<16x32xbf16>, vector<32x32xbf16>, vector<16x32xf32> -> vector<16x32xf32>
    %c0_3 = arith.constant 0 : index
    %c0_4 = arith.constant 0 : index
    %3 = vector.load %arg3[%c0_3, %c0_4] : memref<1x32xf32, #tpu.memory_space<vmem>>, vector<1x32xf32>
    %4 = vector.broadcast %3 : vector<1x32xf32> to vector<16x32xf32>
    %5 = arith.addf %2, %4 : vector<16x32xf32>
    %6 = arith.truncf %5 : vector<16x32xf32> to vector<16x32xbf16>
    %c0_5 = arith.constant 0 : index
    %c0_6 = arith.constant 0 : index
    %7 = vector.load %arg4[%c0_5, %c0_6] : memref<16x32xbf16, #tpu.memory_space<vmem>>, vector<16x32xbf16>
    tpu.vector_store %arg4[%c0_5, %c0_6], %6 {strides = array<i32>} : memref<16x32xbf16, #tpu.memory_space<vmem>>, vector<16x32xbf16>,
    return
  }
  func.func @transform_0(%arg0: i32) -> (i32, i32) {
    %c0_i32 = arith.constant 0 : i32
    %c0_i32_0 = arith.constant 0 : i32
    return %arg0, %c0_i32 : i32, i32
  }
  func.func @transform_1(%arg0: i32) -> (i32, i32) {
    %c0_i32 = arith.constant 0 : i32
    %c0_i32_0 = arith.constant 0 : i32
    %c0_i32_1 = arith.constant 0 : i32
    return %c0_i32, %c0_i32_0 : i32, i32
  }
  func.func @transform_2(%arg0: i32) -> (i32, i32) {
    %c0_i32 = arith.constant 0 : i32
    %c0_i32_0 = arith.constant 0 : i32
    %c0_i32_1 = arith.constant 0 : i32
    return %c0_i32, %c0_i32_0 : i32, i32
  }
  func.func @transform_3(%arg0: i32) -> (i32, i32) {
    %c0_i32 = arith.constant 0 : i32
    %c0_i32_0 = arith.constant 0 : i32
    return %arg0, %c0_i32 : i32, i32
  }
}

module attributes {stable_mosaic.version = 11 : i64} {
  func.func @_ln_kernel(%arg0: i32, %arg1: memref<16x32xbf16, #tpu.memory_space<vmem>>, %arg2: memref<16x32xbf16, #tpu.memory_space<vmem>>, %arg3: memref<1x32xf32, #tpu.memory_space<vmem>>, %arg4: memref<1x32xf32, #tpu.memory_space<vmem>>, %arg5: memref<16x32xbf16, #tpu.memory_space<vmem>>) attributes {dimension_semantics = [#tpu.dimension_semantics<parallel>], iteration_bounds = array<i64: 1>, scalar_prefetch = 0 : i64, scratch_operands = 0 : i64, tpu.core_type = #tpu.core_type<tc>, window_params = [{transform_indices = @transform_0, window_bounds = array<i64: 16, 32>}, {transform_indices = @transform_1, window_bounds = array<i64: 16, 32>}, {pipeline_mode = #tpu.pipeline_mode<synchronous>, transform_indices = @transform_2, window_bounds = array<i64: 1, 32>}, {pipeline_mode = #tpu.pipeline_mode<synchronous>, transform_indices = @transform_3, window_bounds = array<i64: 1, 32>}, {transform_indices = @transform_4, window_bounds = array<i64: 16, 32>}]} {
    %c0 = arith.constant 0 : index
    %c0_0 = arith.constant 0 : index
    %0 = vector.load %arg1[%c0, %c0_0] : memref<16x32xbf16, #tpu.memory_space<vmem>>, vector<16x32xbf16>
    %1 = arith.extf %0 : vector<16x32xbf16> to vector<16x32xf32>
    %c0_1 = arith.constant 0 : index
    %c0_2 = arith.constant 0 : index
    %2 = vector.load %arg2[%c0_1, %c0_2] : memref<16x32xbf16, #tpu.memory_space<vmem>>, vector<16x32xbf16>
    %3 = arith.extf %2 : vector<16x32xbf16> to vector<16x32xf32>
    %4 = arith.addf %1, %3 : vector<16x32xf32>
    %cst = arith.constant dense<0.000000e+00> : vector<16xf32>
    %5 = vector.multi_reduction <add>, %4, %cst [1] : vector<16x32xf32> to vector<16xf32>
    %6 = vector.shape_cast %5 : vector<16xf32> to vector<16x1xf32>
    %cst_3 = arith.constant 3.200000e+01 : f32
    %7 = vector.broadcast %cst_3 : f32 to vector<16x1xf32>
    %8 = arith.divf %6, %7 : vector<16x1xf32>
    %9 = vector.broadcast %8 : vector<16x1xf32> to vector<16x32xf32>
    %10 = arith.subf %4, %9 : vector<16x32xf32>
    %11 = arith.mulf %10, %10 : vector<16x32xf32>
    %cst_4 = arith.constant dense<0.000000e+00> : vector<16xf32>
    %12 = vector.multi_reduction <add>, %11, %cst_4 [1] : vector<16x32xf32> to vector<16xf32>
    %13 = vector.shape_cast %12 : vector<16xf32> to vector<16x1xf32>
    %cst_5 = arith.constant 3.200000e+01 : f32
    %14 = vector.broadcast %cst_5 : f32 to vector<16x1xf32>
    %15 = arith.divf %13, %14 : vector<16x1xf32>
    %16 = vector.broadcast %8 : vector<16x1xf32> to vector<16x32xf32>
    %17 = arith.subf %4, %16 : vector<16x32xf32>
    %cst_6 = arith.constant 9.99999996E-13 : f32
    %18 = vector.broadcast %cst_6 : f32 to vector<16x1xf32>
    %19 = arith.addf %15, %18 : vector<16x1xf32>
    %20 = math.rsqrt %19 : vector<16x1xf32>
    %21 = vector.broadcast %20 : vector<16x1xf32> to vector<16x32xf32>
    %22 = arith.mulf %17, %21 : vector<16x32xf32>
    %c0_7 = arith.constant 0 : index
    %c0_8 = arith.constant 0 : index
    %23 = vector.load %arg3[%c0_7, %c0_8] : memref<1x32xf32, #tpu.memory_space<vmem>>, vector<1x32xf32>
    %24 = vector.broadcast %23 : vector<1x32xf32> to vector<16x32xf32>
    %25 = arith.mulf %22, %24 : vector<16x32xf32>
    %c0_9 = arith.constant 0 : index
    %c0_10 = arith.constant 0 : index
    %26 = vector.load %arg4[%c0_9, %c0_10] : memref<1x32xf32, #tpu.memory_space<vmem>>, vector<1x32xf32>
    %27 = vector.broadcast %26 : vector<1x32xf32> to vector<16x32xf32>
    %28 = arith.addf %25, %27 : vector<16x32xf32>
    %29 = arith.truncf %28 : vector<16x32xf32> to vector<16x32xbf16>
    %c0_11 = arith.constant 0 : index
    %c0_12 = arith.constant 0 : index
    %30 = vector.load %arg5[%c0_11, %c0_12] : memref<16x32xbf16, #tpu.memory_space<vmem>>, vector<16x32xbf16>
    tpu.vector_store %arg5[%c0_11, %c0_12], %29 {strides = array<i32>} : memref<16x32xbf16, #tpu.memory_space<vmem>>, vector<16x32xbf16>,
    return
  }
  func.func @transform_0(%arg0: i32) -> (i32, i32) {
    %c0_i32 = arith.constant 0 : i32
    %c0_i32_0 = arith.constant 0 : i32
    return %arg0, %c0_i32 : i32, i32
  }
  func.func @transform_1(%arg0: i32) -> (i32, i32) {
    %c0_i32 = arith.constant 0 : i32
    %c0_i32_0 = arith.constant 0 : i32
    return %arg0, %c0_i32 : i32, i32
  }
  func.func @transform_2(%arg0: i32) -> (i32, i32) {
    %c0_i32 = arith.constant 0 : i32
    %c0_i32_0 = arith.constant 0 : i32
    %c0_i32_1 = arith.constant 0 : i32
    return %c0_i32, %c0_i32_0 : i32, i32
  }
  func.func @transform_3(%arg0: i32) -> (i32, i32) {
    %c0_i32 = arith.constant 0 : i32
    %c0_i32_0 = arith.constant 0 : i32
    %c0_i32_1 = arith.constant 0 : i32
    return %c0_i32, %c0_i32_0 : i32, i32
  }
  func.func @transform_4(%arg0: i32) -> (i32, i32) {
    %c0_i32 = arith.constant 0 : i32
    %c0_i32_0 = arith.constant 0 : i32
    return %arg0, %c0_i32 : i32, i32
  }
}

module attributes {stable_mosaic.version = 11 : i64} {
  func.func @_dense_resident_kernel(%arg0: i32, %arg1: memref<16x32xbf16, #tpu.memory_space<vmem>>, %arg2: memref<32x64xbf16, #tpu.memory_space<vmem>>, %arg3: memref<1x64xf32, #tpu.memory_space<vmem>>, %arg4: memref<16x64xbf16, #tpu.memory_space<vmem>>) attributes {dimension_semantics = [#tpu.dimension_semantics<parallel>], iteration_bounds = array<i64: 1>, scalar_prefetch = 0 : i64, scratch_operands = 0 : i64, tpu.core_type = #tpu.core_type<tc>, window_params = [{transform_indices = @transform_0, window_bounds = array<i64: 16, 32>}, {pipeline_mode = #tpu.pipeline_mode<synchronous>, transform_indices = @transform_1, window_bounds = array<i64: 32, 64>}, {pipeline_mode = #tpu.pipeline_mode<synchronous>, transform_indices = @transform_2, window_bounds = array<i64: 1, 64>}, {transform_indices = @transform_3, window_bounds = array<i64: 16, 64>}]} {
    %c0 = arith.constant 0 : index
    %c0_0 = arith.constant 0 : index
    %0 = vector.load %arg1[%c0, %c0_0] : memref<16x32xbf16, #tpu.memory_space<vmem>>, vector<16x32xbf16>
    %c0_1 = arith.constant 0 : index
    %c0_2 = arith.constant 0 : index
    %1 = vector.load %arg2[%c0_1, %c0_2] : memref<32x64xbf16, #tpu.memory_space<vmem>>, vector<32x64xbf16>
    %cst = arith.constant dense<0.000000e+00> : vector<16x64xf32>
    %2 = tpu.matmul %0, %1, %cst {dimension_numbers = #tpu.dot_dimension_numbers<[1], [0], [0], [1], [0, 0, 1, 1], [], []>} : vector<16x32xbf16>, vector<32x64xbf16>, vector<16x64xf32> -> vector<16x64xf32>
    %c0_3 = arith.constant 0 : index
    %c0_4 = arith.constant 0 : index
    %3 = vector.load %arg3[%c0_3, %c0_4] : memref<1x64xf32, #tpu.memory_space<vmem>>, vector<1x64xf32>
    %4 = vector.broadcast %3 : vector<1x64xf32> to vector<16x64xf32>
    %5 = arith.addf %2, %4 : vector<16x64xf32>
    %6 = arith.mulf %5, %5 : vector<16x64xf32>
    %7 = arith.mulf %5, %6 : vector<16x64xf32>
    %cst_5 = arith.constant 4.471500e-02 : f32
    %8 = vector.broadcast %cst_5 : f32 to vector<16x64xf32>
    %9 = arith.mulf %8, %7 : vector<16x64xf32>
    %10 = arith.addf %5, %9 : vector<16x64xf32>
    %cst_6 = arith.constant 0.797884583 : f32
    %11 = vector.broadcast %cst_6 : f32 to vector<16x64xf32>
    %12 = arith.mulf %11, %10 : vector<16x64xf32>
    %13 = math.tanh %12 : vector<16x64xf32>
    %cst_7 = arith.constant 1.000000e+00 : f32
    %14 = vector.broadcast %cst_7 : f32 to vector<16x64xf32>
    %15 = arith.addf %14, %13 : vector<16x64xf32>
    %cst_8 = arith.constant 5.000000e-01 : f32
    %16 = vector.broadcast %cst_8 : f32 to vector<16x64xf32>
    %17 = arith.mulf %16, %15 : vector<16x64xf32>
    %18 = arith.mulf %5, %17 : vector<16x64xf32>
    %19 = arith.truncf %18 : vector<16x64xf32> to vector<16x64xbf16>
    %c0_9 = arith.constant 0 : index
    %c0_10 = arith.constant 0 : index
    %20 = vector.load %arg4[%c0_9, %c0_10] : memref<16x64xbf16, #tpu.memory_space<vmem>>, vector<16x64xbf16>
    tpu.vector_store %arg4[%c0_9, %c0_10], %19 {strides = array<i32>} : memref<16x64xbf16, #tpu.memory_space<vmem>>, vector<16x64xbf16>,
    return
  }
  func.func @transform_0(%arg0: i32) -> (i32, i32) {
    %c0_i32 = arith.constant 0 : i32
    %c0_i32_0 = arith.constant 0 : i32
    return %arg0, %c0_i32 : i32, i32
  }
  func.func @transform_1(%arg0: i32) -> (i32, i32) {
    %c0_i32 = arith.constant 0 : i32
    %c0_i32_0 = arith.constant 0 : i32
    %c0_i32_1 = arith.constant 0 : i32
    return %c0_i32, %c0_i32_0 : i32, i32
  }
  func.func @transform_2(%arg0: i32) -> (i32, i32) {
    %c0_i32 = arith.constant 0 : i32
    %c0_i32_0 = arith.constant 0 : i32
    %c0_i32_1 = arith.constant 0 : i32
    return %c0_i32, %c0_i32_0 : i32, i32
  }
  func.func @transform_3(%arg0: i32) -> (i32, i32) {
    %c0_i32 = arith.constant 0 : i32
    %c0_i32_0 = arith.constant 0 : i32
    return %arg0, %c0_i32 : i32, i32
  }
}

module attributes {stable_mosaic.version = 11 : i64} {
  func.func @_dense_resident_kernel(%arg0: i32, %arg1: memref<16x64xbf16, #tpu.memory_space<vmem>>, %arg2: memref<64x32xbf16, #tpu.memory_space<vmem>>, %arg3: memref<1x32xf32, #tpu.memory_space<vmem>>, %arg4: memref<16x32xbf16, #tpu.memory_space<vmem>>) attributes {dimension_semantics = [#tpu.dimension_semantics<parallel>], iteration_bounds = array<i64: 1>, scalar_prefetch = 0 : i64, scratch_operands = 0 : i64, tpu.core_type = #tpu.core_type<tc>, window_params = [{transform_indices = @transform_0, window_bounds = array<i64: 16, 64>}, {pipeline_mode = #tpu.pipeline_mode<synchronous>, transform_indices = @transform_1, window_bounds = array<i64: 64, 32>}, {pipeline_mode = #tpu.pipeline_mode<synchronous>, transform_indices = @transform_2, window_bounds = array<i64: 1, 32>}, {transform_indices = @transform_3, window_bounds = array<i64: 16, 32>}]} {
    %c0 = arith.constant 0 : index
    %c0_0 = arith.constant 0 : index
    %0 = vector.load %arg1[%c0, %c0_0] : memref<16x64xbf16, #tpu.memory_space<vmem>>, vector<16x64xbf16>
    %c0_1 = arith.constant 0 : index
    %c0_2 = arith.constant 0 : index
    %1 = vector.load %arg2[%c0_1, %c0_2] : memref<64x32xbf16, #tpu.memory_space<vmem>>, vector<64x32xbf16>
    %cst = arith.constant dense<0.000000e+00> : vector<16x32xf32>
    %2 = tpu.matmul %0, %1, %cst {dimension_numbers = #tpu.dot_dimension_numbers<[1], [0], [0], [1], [0, 0, 1, 1], [], []>} : vector<16x64xbf16>, vector<64x32xbf16>, vector<16x32xf32> -> vector<16x32xf32>
    %c0_3 = arith.constant 0 : index
    %c0_4 = arith.constant 0 : index
    %3 = vector.load %arg3[%c0_3, %c0_4] : memref<1x32xf32, #tpu.memory_space<vmem>>, vector<1x32xf32>
    %4 = vector.broadcast %3 : vector<1x32xf32> to vector<16x32xf32>
    %5 = arith.addf %2, %4 : vector<16x32xf32>
    %6 = arith.truncf %5 : vector<16x32xf32> to vector<16x32xbf16>
    %c0_5 = arith.constant 0 : index
    %c0_6 = arith.constant 0 : index
    %7 = vector.load %arg4[%c0_5, %c0_6] : memref<16x32xbf16, #tpu.memory_space<vmem>>, vector<16x32xbf16>
    tpu.vector_store %arg4[%c0_5, %c0_6], %6 {strides = array<i32>} : memref<16x32xbf16, #tpu.memory_space<vmem>>, vector<16x32xbf16>,
    return
  }
  func.func @transform_0(%arg0: i32) -> (i32, i32) {
    %c0_i32 = arith.constant 0 : i32
    %c0_i32_0 = arith.constant 0 : i32
    return %arg0, %c0_i32 : i32, i32
  }
  func.func @transform_1(%arg0: i32) -> (i32, i32) {
    %c0_i32 = arith.constant 0 : i32
    %c0_i32_0 = arith.constant 0 : i32
    %c0_i32_1 = arith.constant 0 : i32
    return %c0_i32, %c0_i32_0 : i32, i32
  }
  func.func @transform_2(%arg0: i32) -> (i32, i32) {
    %c0_i32 = arith.constant 0 : i32
    %c0_i32_0 = arith.constant 0 : i32
    %c0_i32_1 = arith.constant 0 : i32
    return %c0_i32, %c0_i32_0 : i32, i32
  }
  func.func @transform_3(%arg0: i32) -> (i32, i32) {
    %c0_i32 = arith.constant 0 : i32
    %c0_i32_0 = arith.constant 0 : i32
    return %arg0, %c0_i32 : i32, i32
  }
}

</mosaic_0001>

<llo_original>
// kernel: bert_cls_forward.16
$region0: #{bert_cls_forward.16}
  #allocation0 [shape = 'u32[]', space=smem, size = 0x4, offset = 0x4, fixed_abs, tag = 'smem constant byte address 0x4 - core index']
  #allocation1 [shape = 'u32[72,128]{1,0:T(1,128)}', space=vmem, size = 0x9000, scoped, tag = 'internal scratch']
  %s0 = inlined_call_operand.vmem [shape: bf16[16,32], index: 0, kind: input, shape index: {}]
  %s1 = inlined_call_operand.vmem [shape: bf16[32,96], index: 1, kind: input, shape index: {}]
  %s2 = inlined_call_operand.vmem [shape: f32[1,96], index: 2, kind: input, shape index: {}]
  %s3 = inlined_call_operand.vmem [shape: bf16[16,96], index: 3, kind: output, shape index: {}]
  %s4 = sld [smem:[#allocation0]]
  $region22: #{bert_cls_forward.16} parent=0
    _
  %s6 = ssub.s32 1, %s4
  %s7 = scalar_select 0, %s6, %s4
  // Predicated region
  $region2: #{bert_cls_forward.16} parent=0 // pred_check
    _
  $region3: #{bert_cls_forward.16} parent=0 // pred_check_branch
    %9 = sbr.rel (0) target = $region5
  $region4: #{bert_cls_forward.16} parent=0 // pred_region
    _
  $region5: #{bert_cls_forward.16} parent=0 // pred_fallthru
    _
  // Predicated region
  $region6: #{bert_cls_forward.16} parent=0 // pred_check
    _
  $region7: #{bert_cls_forward.16} parent=0 // pred_check_branch
    %11 = sbr.rel (0) target = $region9
  $region8: #{bert_cls_forward.16} parent=0 // pred_region
    _
  $region9: #{bert_cls_forward.16} parent=0 // pred_fallthru
    _
  // Predicated region
  $region10: #{bert_cls_forward.16} parent=0 // pred_check
    _
  $region11: #{bert_cls_forward.16} parent=0 // pred_check_branch
    %13 = sbr.rel (0) target = $region13
  $region12: #{bert_cls_forward.16} parent=0 // pred_region
    _
  $region13: #{bert_cls_forward.16} parent=0 // pred_fallthru
    _
  %v15 = vld [vmem:[%s0] sm:$0xf]
  %v16 = vld [vmem:[%s0 + $0x4] sm:$0xf]
  %v17 = vld [vmem:[%s1] sm:$0xf]
  %v18 = vld [vmem:[%s1 + $0x4] sm:$0xf]
  %v19 = vld [vmem:[%s1 + $0x8] sm:$0xf]
  %v20 = vld [vmem:[%s1 + $0xc] sm:$0xf]
  %v21 = vld [vmem:[%s2] sm:$0x1]
  %v23 = vperm.slane %v21, 0
  %v27 = vunpack.c.l.b16 %v15
  %v28 = vunpack.c.l.b16 %v16
  %v29 = vpack.c.b16 %v28, %v27
  %v34 = vunpack.c.l.b16 %v17
  %v35 = vunpack.c.l.b16 %v18
  %v36 = vunpack.c.l.b16 %v19
  %v37 = vunpack.c.l.b16 %v20
  %v38 = vpack.c.b16 %v35, %v34
  %v39 = vpack.c.b16 %v37, %v36
  %vm42 = vcmask 261120
  %v44 = vsel %vm42, %v29, 0
  %46 = vmatpush.bf16.msra.mxu0 0
  %47 = vmatpush.bf16.msra.mxu0 0
  %48 = vmatpush.bf16.msra.mxu0 0
  %49 = vmatpush.bf16.msra.mxu0 0
  %50 = vmatpush.bf16.msra.mxu0 0
  %51 = vmatpush.bf16.msra.mxu0 0
  %52 = vmatpush.bf16.msra.mxu0 %v39
  %53 = vmatpush.bf16.msra.mxu0 %v38
  %54 = vmatmul.bf16.gmra.mxu0 %v44
  %v55 = vpop.f32.mrf.mxu0
  %v56 = vadd.f32 %v23, %v55
  %v57 = vpop.f32.mrf.mxu0
  %v58 = vadd.f32 %v23, %v57
  %59 = vdwg.mxu0
  %v60 = vpack.c.bf16 %v56, %v56
  %v61 = vpack.c.bf16 %v58, %v58
  %vm62 = vcmask 781312
  %63 = vst.msk [vmem:[%s3] sm:$0xf] %vm62, %v60
  %64 = vst.msk [vmem:[%s3 + $0x4] sm:$0xf] %vm62, %v61
  // Predicated region
  $region14: #{bert_cls_forward.16} parent=0 // pred_check
    _
  $region15: #{bert_cls_forward.16} parent=0 // pred_check_branch
    %66 = sbr.rel (0) target = $region17
  $region16: #{bert_cls_forward.16} parent=0 // pred_region
    _
  $region17: #{bert_cls_forward.16} parent=0 // pred_fallthru
    _
  // Predicated region
  $region18: #{bert_cls_forward.16} parent=0 // pred_check
    _
  $region19: #{bert_cls_forward.16} parent=0 // pred_check_branch
    %68 = sbr.rel (0) target = $region21
  $region20: #{bert_cls_forward.16} parent=0 // pred_region
    _
  $region21: #{bert_cls_forward.16} parent=0 // pred_fallthru
    _

// kernel: bert_cls_forward.18
$region0: #{bert_cls_forward.18}
  #allocation0 [shape = 'u32[]', space=smem, size = 0x4, offset = 0x4, fixed_abs, tag = 'smem constant byte address 0x4 - core index']
  #allocation1 [shape = 'u32[72,128]{1,0:T(1,128)}', space=vmem, size = 0x9000, scoped, tag = 'internal scratch']
  %s0 = inlined_call_operand.vmem [shape: bf16[16,32], index: 0, kind: input, shape index: {}]
  %s1 = inlined_call_operand.vmem [shape: bf16[32,32], index: 1, kind: input, shape index: {}]
  %s2 = inlined_call_operand.vmem [shape: f32[1,32], index: 2, kind: input, shape index: {}]
  %s3 = inlined_call_operand.vmem [shape: bf16[16,32], index: 3, kind: output, shape index: {}]
  %s4 = sld [smem:[#allocation0]]
  $region22: #{bert_cls_forward.18} parent=0
    _
  %s6 = ssub.s32 1, %s4
  %s7 = scalar_select 0, %s6, %s4
  // Predicated region
  $region2: #{bert_cls_forward.18} parent=0 // pred_check
    _
  $region3: #{bert_cls_forward.18} parent=0 // pred_check_branch
    %9 = sbr.rel (0) target = $region5
  $region4: #{bert_cls_forward.18} parent=0 // pred_region
    _
  $region5: #{bert_cls_forward.18} parent=0 // pred_fallthru
    _
  // Predicated region
  $region6: #{bert_cls_forward.18} parent=0 // pred_check
    _
  $region7: #{bert_cls_forward.18} parent=0 // pred_check_branch
    %11 = sbr.rel (0) target = $region9
  $region8: #{bert_cls_forward.18} parent=0 // pred_region
    _
  $region9: #{bert_cls_forward.18} parent=0 // pred_fallthru
    _
  // Predicated region
  $region10: #{bert_cls_forward.18} parent=0 // pred_check
    _
  $region11: #{bert_cls_forward.18} parent=0 // pred_check_branch
    %13 = sbr.rel (0) target = $region13
  $region12: #{bert_cls_forward.18} parent=0 // pred_region
    _
  $region13: #{bert_cls_forward.18} parent=0 // pred_fallthru
    _
  %v15 = vld [vmem:[%s0] sm:$0xf]
  %v16 = vld [vmem:[%s0 + $0x4] sm:$0xf]
  %v17 = vld [vmem:[%s1] sm:$0xf]
  %v18 = vld [vmem:[%s1 + $0x4] sm:$0xf]
  %v19 = vld [vmem:[%s1 + $0x8] sm:$0xf]
  %v20 = vld [vmem:[%s1 + $0xc] sm:$0xf]
  %v21 = vld [vmem:[%s2] sm:$0x1]
  %v23 = vperm.slane %v21, 0
  %v27 = vunpack.c.l.b16 %v15
  %v28 = vunpack.c.l.b16 %v16
  %v29 = vpack.c.b16 %v28, %v27
  %v34 = vunpack.c.l.b16 %v17
  %v35 = vunpack.c.l.b16 %v18
  %v36 = vunpack.c.l.b16 %v19
  %v37 = vunpack.c.l.b16 %v20
  %v38 = vpack.c.b16 %v35, %v34
  %v39 = vpack.c.b16 %v37, %v36
  %vm42 = vcmask 261120
  %v44 = vsel %vm42, %v29, 0
  %46 = vmatpush.bf16.msra.mxu0 0
  %47 = vmatpush.bf16.msra.mxu0 0
  %48 = vmatpush.bf16.msra.mxu0 0
  %49 = vmatpush.bf16.msra.mxu0 0
  %50 = vmatpush.bf16.msra.mxu0 0
  %51 = vmatpush.bf16.msra.mxu0 0
  %52 = vmatpush.bf16.msra.mxu0 %v39
  %53 = vmatpush.bf16.msra.mxu0 %v38
  %54 = vmatmul.bf16.gmra.mxu0 %v44
  %v55 = vpop.f32.mrf.mxu0
  %v56 = vadd.f32 %v23, %v55
  %v57 = vpop.f32.mrf.mxu0
  %v58 = vadd.f32 %v23, %v57
  %59 = vdwg.mxu0
  %v60 = vpack.c.bf16 %v56, %v56
  %v61 = vpack.c.bf16 %v58, %v58
  %vm62 = vcmask 257024
  %63 = vst.msk [vmem:[%s3] sm:$0xf] %vm62, %v60
  %64 = vst.msk [vmem:[%s3 + $0x4] sm:$0xf] %vm62, %v61
  // Predicated region
  $region14: #{bert_cls_forward.18} parent=0 // pred_check
    _
  $region15: #{bert_cls_forward.18} parent=0 // pred_check_branch
    %66 = sbr.rel (0) target = $region17
  $region16: #{bert_cls_forward.18} parent=0 // pred_region
    _
  $region17: #{bert_cls_forward.18} parent=0 // pred_fallthru
    _
  // Predicated region
  $region18: #{bert_cls_forward.18} parent=0 // pred_check
    _
  $region19: #{bert_cls_forward.18} parent=0 // pred_check_branch
    %68 = sbr.rel (0) target = $region21
  $region20: #{bert_cls_forward.18} parent=0 // pred_region
    _
  $region21: #{bert_cls_forward.18} parent=0 // pred_fallthru
    _

// kernel: bert_cls_forward.15
$region0: #{bert_cls_forward.15}
  #allocation0 [shape = 'u32[]', space=smem, size = 0x4, offset = 0x4, fixed_abs, tag = 'smem constant byte address 0x4 - core index']
  #allocation1 [shape = 'u32[72,128]{1,0:T(1,128)}', space=vmem, size = 0x9000, scoped, tag = 'internal scratch']
  %s0 = inlined_call_operand.vmem [shape: f32[16,32], index: 0, kind: input, shape index: {}]
  %s1 = inlined_call_operand.vmem [shape: f32[1,32], index: 1, kind: input, shape index: {}]
  %s2 = inlined_call_operand.vmem [shape: f32[1,32], index: 2, kind: input, shape index: {}]
  %s3 = inlined_call_operand.vmem [shape: bf16[16,32], index: 3, kind: output, shape index: {}]
  %s4 = sld [smem:[#allocation0]]
  $region22: #{bert_cls_forward.15} parent=0
    _
  %s6 = ssub.s32 1, %s4
  %s7 = scalar_select 0, %s6, %s4
  // Predicated region
  $region2: #{bert_cls_forward.15} parent=0 // pred_check
    _
  $region3: #{bert_cls_forward.15} parent=0 // pred_check_branch
    %9 = sbr.rel (0) target = $region5
  $region4: #{bert_cls_forward.15} parent=0 // pred_region
    _
  $region5: #{bert_cls_forward.15} parent=0 // pred_fallthru
    _
  // Predicated region
  $region6: #{bert_cls_forward.15} parent=0 // pred_check
    _
  $region7: #{bert_cls_forward.15} parent=0 // pred_check_branch
    %11 = sbr.rel (0) target = $region9
  $region8: #{bert_cls_forward.15} parent=0 // pred_region
    _
  $region9: #{bert_cls_forward.15} parent=0 // pred_fallthru
    _
  // Predicated region
  $region10: #{bert_cls_forward.15} parent=0 // pred_check
    _
  $region11: #{bert_cls_forward.15} parent=0 // pred_check_branch
    %13 = sbr.rel (0) target = $region13
  $region12: #{bert_cls_forward.15} parent=0 // pred_region
    _
  $region13: #{bert_cls_forward.15} parent=0 // pred_fallthru
    _
  %v14 = vld [vmem:[%s0] sm:$0xff]
  %v15 = vld [vmem:[%s0 + $0x8] sm:$0xff]
  %vm16 = vcmask 261120
  %v17 = vsel %vm16, %v14, 0.0
  %18 = vadd.xlane.f32.xlu0 %v17
  %v19 = vpop.xlane.xlu0 %18
  %v20 = vsel %vm16, %v15, 0.0
  %21 = vadd.xlane.f32.xlu0 %v20
  %v22 = vpop.xlane.xlu0 %21
  %v23 = vrcp.pop 32.0
  %v24 = vmul.f32 32.0, %v23
  %v25 = vsub.f32 1.0, %v24
  %v26 = vmul.f32 %v23, %v25
  %v27 = vadd.f32 %v23, %v26
  %vm28 = vweird.f32 %v23
  %v29 = vsel %vm28, %v23, %v27
  %v30 = vmul.f32 %v19, %v29
  %v31 = vmul.f32 %v22, %v29
  %v32 = vsub.f32 %v14, %v30
  %v33 = vsub.f32 %v15, %v31
  %v34 = vmul.f32 %v32, %v32
  %v35 = vmul.f32 %v33, %v33
  %v36 = vsel %vm16, %v34, 0.0
  %37 = vadd.xlane.f32.xlu0 %v36
  %v38 = vpop.xlane.xlu0 %37
  %v39 = vsel %vm16, %v35, 0.0
  %40 = vadd.xlane.f32.xlu0 %v39
  %v41 = vpop.xlane.xlu0 %40
  %v42 = vmul.f32 %v38, %v29
  %v43 = vmul.f32 %v41, %v29
  %v44 = vadd.f32 %v42, 1e-12
  %v45 = vadd.f32 %v43, 1e-12
  %v46 = vrsqrt.pop %v44
  %v47 = vmul.f32 %v46, %v44
  %v48 = vmul.f32 %v47, %v46
  %v49 = vmul.f32 0.5, %v48
  %v50 = vsub.f32 1.5, %v49
  %v51 = vmul.f32 %v46, %v50
  %vm52 = vweird.f32 %v44
  %vm53 = vweird.f32 %v46
  %vm54 = vmor %vm52, %vm53
  %v55 = vsel %vm54, %v46, %v51
  %v56 = vrsqrt.pop %v45
  %v57 = vmul.f32 %v56, %v45
  %v58 = vmul.f32 %v57, %v56
  %v59 = vmul.f32 0.5, %v58
  %v60 = vsub.f32 1.5, %v59
  %v61 = vmul.f32 %v56, %v60
  %vm62 = vweird.f32 %v45
  %vm63 = vweird.f32 %v56
  %vm64 = vmor %vm62, %vm63
  %v65 = vsel %vm64, %v56, %v61
  %v66 = vmul.f32 %v32, %v55
  %v67 = vmul.f32 %v33, %v65
  %v68 = vld [vmem:[%s1] sm:$0x1]
  %v70 = vperm.slane %v68, 0
  %v72 = vmul.f32 %v66, %v70
  %v73 = vmul.f32 %v67, %v70
  %v74 = vld [vmem:[%s2] sm:$0x1]
  %v76 = vperm.slane %v74, 0
  %v78 = vadd.f32 %v72, %v76
  %v79 = vadd.f32 %v73, %v76
  %v80 = vpack.c.bf16 %v78, %v78
  %v81 = vpack.c.bf16 %v79, %v79
  %vm82 = vcmask 257024
  %83 = vst.msk [vmem:[%s3] sm:$0xf] %vm82, %v80
  %84 = vst.msk [vmem:[%s3 + $0x4] sm:$0xf] %vm82, %v81
  // Predicated region
  $region14: #{bert_cls_forward.15} parent=0 // pred_check
    _
  $region15: #{bert_cls_forward.15} parent=0 // pred_check_branch
    %86 = sbr.rel (0) target = $region17
  $region16: #{bert_cls_forward.15} parent=0 // pred_region
    _
  $region17: #{bert_cls_forward.15} parent=0 // pred_fallthru
    _
  // Predicated region
  $region18: #{bert_cls_forward.15} parent=0 // pred_check
    _
  $region19: #{bert_cls_forward.15} parent=0 // pred_check_branch
    %88 = sbr.rel (0) target = $region21
  $region20: #{bert_cls_forward.15} parent=0 // pred_region
    _
  $region21: #{bert_cls_forward.15} parent=0 // pred_fallthru
    _

// kernel: bert_cls_forward.17
$region0: #{bert_cls_forward.17}
  #allocation0 [shape = 'u32[]', space=smem, size = 0x4, offset = 0x4, fixed_abs, tag = 'smem constant byte address 0x4 - core index']
  #allocation1 [shape = 'u32[72,128]{1,0:T(1,128)}', space=vmem, size = 0x9000, scoped, tag = 'internal scratch']
  %s0 = inlined_call_operand.vmem [shape: bf16[2,8,96], index: 0, kind: input, shape index: {}]
  %s1 = inlined_call_operand.vmem [shape: f32[2,1,8], index: 1, kind: input, shape index: {}]
  %s2 = inlined_call_operand.vmem [shape: bf16[2,8,32], index: 2, kind: output, shape index: {}]
  %s3 = sld [smem:[#allocation0]]
  $region41: #{bert_cls_forward.17} parent=0
    _
  %s5 = ssub.s32 1, %s3
  %s6 = scalar_select 0, %s5, %s3
  loop: start=0, step=1, limit=4
  $region2: #{bert_cls_forward.17} parent=0 // loop_pre_header
    _
  $region3: #{bert_cls_forward.17} parent=0 // loop_header
    %s8 = sphi 0, %s12
    %p9 = scmp.ge.s32.totalorder %s8, 4
    %s15 = sphi 0, %s27
    %s16 = sphi 0, %s23
    %s17 = sphi 0, %s15
    %s18 = sphi 0, %s16
    %s19 = sphi 0, %s17
    %s20 = sphi 0, %s18
    %s32 = sphi 0, %s34
    %s35 = sphi 0, %s32
    %s36 = sphi 0, %s35
    %s52 = sphi 0, %s36
    %s58 = sphi 0, %s60
    %s61 = sphi 0, %s58
    %s62 = sphi 0, %s61
    %s78 = sphi 0, %s62
    %s86 = sphi 0, %s88
    %s89 = sphi 0, %s86
    %s90 = sphi 0, %s89
    %s106 = sphi 0, %s90
  $region4: #{bert_cls_forward.17} parent=0 // loop_header_branch
    %11 = sbr.rel (%p9) target = $region8
  $region5: #{bert_cls_forward.17} parent=0 // loop_body
    %s13 = ssub.s32 %s8, 1
    %s14 = ssub.s32 %s8, 2
    %s21 = sadd.s32 1, %s16
    %p22 = scmp.ge.s32.totalorder %s21, 1
    %s23 = scalar_select %p22, 0, %s21
    %s24 = sadd.s32 1, %s15
    %s25 = scalar_select %p22, %s24, %s15
    %p26 = scmp.ge.s32.totalorder %s25, 2
    %s27 = scalar_select %p26, 0, %s25
    %s28 = ssub.s32 %s15, %s27
    %s29 = ssub.s32 %s16, %s23
    %s30 = sor.u32 %s28, %s29
    %p31 = scmp.eq.s32.totalorder %s30, 0
    %s33 = sadd.s32 %s32, 1
    %s34 = scalar_select %p31, %s32, %s33
    %p37 = pneg %p31
    %p38 = scmp.eq.s32.totalorder %s8, 1
    %p39 = por %p37, %p38
    %p40 = scmp.ne.s32.totalorder %s32, %s35
    %p41 = scmp.eq.s32.totalorder %s8, 0
    %p42 = por %p40, %p41
    %p43 = scmp.ne.s32.totalorder %s32, %s35
    %p44 = scmp.eq.s32.totalorder %s13, 1
    %p45 = por %p43, %p44
    %p46 = scmp.ne.s32.totalorder %s35, %s36
    %p47 = scmp.eq.s32.totalorder %s13, 0
    %p48 = por %p46, %p47
    %p49 = scmp.ne.s32.totalorder %s35, %s36
    %p50 = scmp.eq.s32.totalorder %s14, 1
    %p51 = por %p49, %p50
    %p53 = scmp.ne.s32.totalorder %s36, %s52
    %p54 = scmp.eq.s32.totalorder %s14, 0
    %p55 = por %p53, %p54
    %s56 = ssub.s32 %s15, %s27
    %p57 = scmp.eq.s32.totalorder %s56, 0
    %s59 = sadd.s32 %s58, 1
    %s60 = scalar_select %p57, %s58, %s59
    %p63 = pneg %p57
    %p64 = scmp.eq.s32.totalorder %s8, 1
    %p65 = por %p63, %p64
    %p66 = scmp.ne.s32.totalorder %s58, %s61
    %p67 = scmp.eq.s32.totalorder %s8, 0
    %p68 = por %p66, %p67
    %p69 = scmp.ne.s32.totalorder %s58, %s61
    %p70 = scmp.eq.s32.totalorder %s13, 1
    %p71 = por %p69, %p70
    %p72 = scmp.ne.s32.totalorder %s61, %s62
    %p73 = scmp.eq.s32.totalorder %s13, 0
    %p74 = por %p72, %p73
    %p75 = scmp.ne.s32.totalorder %s61, %s62
    %p76 = scmp.eq.s32.totalorder %s14, 1
    %p77 = por %p75, %p76
    %p79 = scmp.ne.s32.totalorder %s62, %s78
    %p80 = scmp.eq.s32.totalorder %s14, 0
    %p81 = por %p79, %p80
    %s82 = ssub.s32 %s15, %s27
    %s83 = ssub.s32 %s16, %s23
    %s84 = sor.u32 %s82, %s83
    %p85 = scmp.eq.s32.totalorder %s84, 0
    %s87 = sadd.s32 %s86, 1
    %s88 = scalar_select %p85, %s86, %s87
    %p91 = pneg %p85
    %p92 = scmp.eq.s32.totalorder %s8, 1
    %p93 = por %p91, %p92
    %p94 = scmp.ne.s32.totalorder %s86, %s89
    %p95 = scmp.eq.s32.totalorder %s8, 0
    %p96 = por %p94, %p95
    %p97 = scmp.ne.s32.totalorder %s86, %s89
    %p98 = scmp.eq.s32.totalorder %s13, 1
    %p99 = por %p97, %p98
    %p100 = scmp.ne.s32.totalorder %s89, %s90
    %p101 = scmp.eq.s32.totalorder %s13, 0
    %p102 = por %p100, %p101
    %p103 = scmp.ne.s32.totalorder %s89, %s90
    %p104 = scmp.eq.s32.totalorder %s14, 1
    %p105 = por %p103, %p104
    %p107 = scmp.ne.s32.totalorder %s90, %s106
    %p108 = scmp.eq.s32.totalorder %s14, 0
    %p109 = por %p107, %p108
    %p110 = scmp.le.s32.totalorder 1, %s8
    %p111 = scmp.lt.s32.totalorder %s8, 3
    %p112 = pnand %p110, %p111
    %p113 = pneg %p112
    // Predicated region
    $region9: #{bert_cls_forward.17} parent=5 // pred_check
      _
    $region10: #{bert_cls_forward.17} parent=5 // pred_check_branch
      %115 = sbr.rel (%p112) target = $region12
    $region11: #{bert_cls_forward.17} parent=5 // pred_region
      %s116 = ssub.s32 %s8, 1
    $region12: #{bert_cls_forward.17} parent=5 // pred_fallthru
      _
    %p117 = scmp.lt.s32.totalorder %s8, 2
    // Predicated region
    $region13: #{bert_cls_forward.17} parent=5 // pred_check
      %p118 = pneg %p117
    $region14: #{bert_cls_forward.17} parent=5 // pred_check_branch
      %120 = sbr.rel (%p118) target = $region16
    $region15: #{bert_cls_forward.17} parent=5 // pred_region
      // Predicated region
      $region17: #{bert_cls_forward.17} parent=15 // pred_check
        %p121 = pneg %p42
      $region18: #{bert_cls_forward.17} parent=15 // pred_check_branch
        %123 = sbr.rel (%p121) target = $region20
      $region19: #{bert_cls_forward.17} parent=15 // pred_region
        %p124 = scmp.lt.s32.totalorder %s15, 1
        %s125 = scalar_select %p124, %s15, 1
        %p126 = scmp.lt.s32.totalorder %s16, 0
        %s127 = scalar_select %p126, %s16, 0
        %s128 = sadd.s32 %s127, %s125
        %s129 = smul.addr %s128, 4
        %s130 = scalar_lea.vmem %s0, %s129
      $region20: #{bert_cls_forward.17} parent=15 // pred_fallthru
        _
      // Predicated region
      $region21: #{bert_cls_forward.17} parent=15 // pred_check
        %p131 = pneg %p68
      $region22: #{bert_cls_forward.17} parent=15 // pred_check_branch
        %133 = sbr.rel (%p131) target = $region24
      $region23: #{bert_cls_forward.17} parent=15 // pred_region
        %p134 = scmp.lt.s32.totalorder %s15, 1
        %s135 = scalar_select %p134, %s15, 1
        %s136 = scalar_lea.vmem %s1, %s135
      $region24: #{bert_cls_forward.17} parent=15 // pred_fallthru
        _
    $region16: #{bert_cls_forward.17} parent=5 // pred_fallthru
      _
    %p137 = scmp.le.s32.totalorder 1, %s8
    %p138 = scmp.lt.s32.totalorder %s8, 3
    %p139 = pnand %p137, %p138
    %p140 = pneg %p139
    // Predicated region
    $region25: #{bert_cls_forward.17} parent=5 // pred_check
      _
    $region26: #{bert_cls_forward.17} parent=5 // pred_check_branch
      %142 = sbr.rel (%p139) target = $region28
    $region27: #{bert_cls_forward.17} parent=5 // pred_region
      %s143 = ssub.s32 %s8, 1
      %p144 = scmp.lt.s32.totalorder %s17, 1
      %s145 = scalar_select %p144, %s17, 1
      %p146 = scmp.lt.s32.totalorder %s18, 0
      %s147 = scalar_select %p146, %s18, 0
      %s148 = sadd.s32 %s147, %s145
      %s149 = smul.addr %s148, 4
      %s150 = scalar_lea.vmem %s0, %s149
      %p151 = pneg %p48
      %p152 = pneg %p45
      %p153 = scmp.lt.s32.totalorder %s17, 1
      %s154 = scalar_select %p153, %s17, 1
      %s155 = scalar_lea.vmem %s1, %s154
      %p156 = pneg %p74
      %p157 = pneg %p71
      %p158 = pneg %p102
      %p159 = pneg %p99
      %p160 = scmp.lt.s32.totalorder %s17, 1
      %s161 = scalar_select %p160, %s17, 1
      %p162 = scmp.lt.s32.totalorder %s18, 0
      %s163 = scalar_select %p162, %s18, 0
      %s164 = sadd.s32 %s163, %s161
      %s165 = smul.addr %s164, 4
      %s166 = scalar_lea.vmem %s2, %s165
      %p167 = scmp.lt.s32.totalorder %s17, 1
      %s168 = scalar_select %p167, %s17, 1
      %p169 = scmp.lt.s32.totalorder %s18, 0
      %s170 = scalar_select %p169, %s18, 0
      %s171 = sadd.s32 %s170, %s168
      %s172 = smul.addr %s171, 4
      %s173 = scalar_lea.vmem %s0, %s172
      %p174 = scmp.lt.s32.totalorder %s17, 1
      %s175 = scalar_select %p174, %s17, 1
      %s176 = scalar_lea.vmem %s1, %s175
      %p177 = scmp.lt.s32.totalorder %s17, 1
      %s178 = scalar_select %p177, %s17, 1
      %p179 = scmp.lt.s32.totalorder %s18, 0
      %s180 = scalar_select %p179, %s18, 0
      %s181 = sadd.s32 %s180, %s178
      %s182 = smul.addr %s181, 4
      %s183 = scalar_lea.vmem %s2, %s182
      %v185 = vld [vmem:[%s173] sm:$0xf]
      %v186 = vld [vmem:[%s176] sm:$0x1]
      %v188 = vperm.slane %v186, 0
      %v191 = vunpack.c.l.b16 %v185
      %v192 = vpack.c.b16 %v191, %v191
      %193 = vrot.lane.b32.xlu0 %v192, 96
      %v194 = vpop.permute.xlu0 %193
      %vm195 = vcmask 130048
      %v197 = vsel %vm195, %v185, 0
      %v200 = vsel %vm195, %v194, 0
      %202 = vmatpush.bf16.xpose.msra.mxu0 0
      %203 = vmatpush.bf16.xpose.msra.mxu0 0
      %204 = vmatpush.bf16.xpose.msra.mxu0 0
      %205 = vmatpush.bf16.xpose.msra.mxu0 0
      %206 = vmatpush.bf16.xpose.msra.mxu0 0
      %207 = vmatpush.bf16.xpose.msra.mxu0 0
      %208 = vmatpush.bf16.xpose.msra.mxu0 0
      %209 = vmatpush.bf16.xpose.msra.mxu0 %v200
      %210 = vmatmul.bf16.gmra.mxu0 %v197
      %v211 = vpop.f32.mrf.mxu0
      %v212 = vadd.f32 %v188, %v211
      %v213 = vpop.f32.mrf.mxu0
      %214 = vdwg.mxu0
      %vm215 = vcmask 64512
      %v216 = vsel %vm215, %v212, -inf
      %217 = vmax.xlane.f32.xlu0 %v216
      %v218 = vpop.xlane.xlu0 %217
      %v219 = vsub.f32 %v212, %v218
      %v220 = vmul.f32 %v219, 1.442695
      %v221 = vpow.pop %v220
      %v222 = vsel %vm215, %v221, 0.0
      %223 = vadd.xlane.f32.xlu0 %v222
      %v224 = vpop.xlane.xlu0 %223
      %v225 = vrcp.pop %v224
      %v226 = vmul.f32 %v221, %v225
      %v227 = vpack.c.bf16 %v226, %v226
      %228 = vrot.lane.b32.xlu0 %v192, 64
      %v229 = vpop.permute.xlu0 %228
      %v231 = vsel %vm215, %v227, 0
      %vm233 = vcmask 1043456
      %v235 = vsel %vm233, %v229, 0
      %237 = vmatpush.bf16.msra.mxu0 0
      %238 = vmatpush.bf16.msra.mxu0 0
      %239 = vmatpush.bf16.msra.mxu0 0
      %240 = vmatpush.bf16.msra.mxu0 0
      %241 = vmatpush.bf16.msra.mxu0 0
      %242 = vmatpush.bf16.msra.mxu0 0
      %243 = vmatpush.bf16.msra.mxu0 0
      %244 = vmatpush.bf16.msra.mxu0 %v235
      %245 = vmatmul.bf16.gmra.mxu0 %v231
      %v246 = vpop.f32.mrf.mxu0
      %v247 = vadd.f32 0.0, %v246
      %v248 = vpop.f32.mrf.mxu0
      %249 = vdwg.mxu0
      %250 = vrot.lane.b32.xlu0 %v192, 112
      %v251 = vpop.permute.xlu0 %250
      %252 = vrot.lane.b32.xlu0 %v192, 80
      %v253 = vpop.permute.xlu0 %252
      %v255 = vsel %vm195, %v251, 0
      %v258 = vsel %vm195, %v253, 0
      %260 = vmatpush.bf16.xpose.msra.mxu0 0
      %261 = vmatpush.bf16.xpose.msra.mxu0 0
      %262 = vmatpush.bf16.xpose.msra.mxu0 0
      %263 = vmatpush.bf16.xpose.msra.mxu0 0
      %264 = vmatpush.bf16.xpose.msra.mxu0 0
      %265 = vmatpush.bf16.xpose.msra.mxu0 0
      %266 = vmatpush.bf16.xpose.msra.mxu0 0
      %267 = vmatpush.bf16.xpose.msra.mxu0 %v258
      %268 = vmatmul.bf16.gmra.mxu0 %v255
      %v269 = vpop.f32.mrf.mxu0
      %v270 = vadd.f32 %v188, %v269
      %v271 = vpop.f32.mrf.mxu0
      %272 = vdwg.mxu0
      %v273 = vsel %vm215, %v270, -inf
      %274 = vmax.xlane.f32.xlu0 %v273
      %v275 = vpop.xlane.xlu0 %274
      %v276 = vsub.f32 %v270, %v275
      %v277 = vmul.f32 %v276, 1.442695
      %v278 = vpow.pop %v277
      %v279 = vsel %vm215, %v278, 0.0
      %280 = vadd.xlane.f32.xlu0 %v279
      %v281 = vpop.xlane.xlu0 %280
      %v282 = vrcp.pop %v281
      %v283 = vmul.f32 %v278, %v282
      %v284 = vpack.c.bf16 %v283, %v283
      %285 = vrot.lane.b32.xlu0 %v192, 48
      %v286 = vpop.permute.xlu0 %285
      %v288 = vsel %vm215, %v284, 0
      %v291 = vsel %vm233, %v286, 0
      %293 = vmatpush.bf16.msra.mxu0 0
      %294 = vmatpush.bf16.msra.mxu0 0
      %295 = vmatpush.bf16.msra.mxu0 0
      %296 = vmatpush.bf16.msra.mxu0 0
      %297 = vmatpush.bf16.msra.mxu0 0
      %298 = vmatpush.bf16.msra.mxu0 0
      %299 = vmatpush.bf16.msra.mxu0 0
      %300 = vmatpush.bf16.msra.mxu0 %v291
      %301 = vmatmul.bf16.gmra.mxu0 %v288
      %v302 = vpop.f32.mrf.mxu0
      %v303 = vadd.f32 0.0, %v302
      %v304 = vpop.f32.mrf.mxu0
      %305 = vdwg.mxu0
      %307 = vrot.lane.b32.xlu0 %v303, 16
      %v308 = vpop.permute.xlu0 %307
      %v310 = vsel %vm195, %v247, %v308
      %v311 = vpack.c.bf16 %v310, %v310
      %vm312 = vcmask 257024
      %313 = vst.msk [vmem:[%s183] sm:$0xf] %vm312, %v311
      %p314 = scmp.lt.s32.totalorder %s17, 1
      %s315 = scalar_select %p314, %s17, 1
      %p316 = scmp.lt.s32.totalorder %s18, 0
      %s317 = scalar_select %p316, %s18, 0
      %s318 = sadd.s32 %s317, %s315
      %s319 = smul.addr %s318, 4
      %s320 = scalar_lea.vmem %s2, %s319
      // Predicated region
      $region29: #{bert_cls_forward.17} parent=27 // pred_check
        %p321 = pneg %p99
      $region30: #{bert_cls_forward.17} parent=27 // pred_check_branch
        %323 = sbr.rel (%p321) target = $region32
      $region31: #{bert_cls_forward.17} parent=27 // pred_region
        _
      $region32: #{bert_cls_forward.17} parent=27 // pred_fallthru
        _
    $region28: #{bert_cls_forward.17} parent=5 // pred_fallthru
      _
    %p324 = scmp.le.s32.totalorder 2, %s8
    // Predicated region
    $region33: #{bert_cls_forward.17} parent=5 // pred_check
      %p325 = pneg %p324
    $region34: #{bert_cls_forward.17} parent=5 // pred_check_branch
      %327 = sbr.rel (%p325) target = $region36
    $region35: #{bert_cls_forward.17} parent=5 // pred_region
      %s328 = ssub.s32 %s8, 2
      // Predicated region
      $region37: #{bert_cls_forward.17} parent=35 // pred_check
        %p329 = pneg %p105
      $region38: #{bert_cls_forward.17} parent=35 // pred_check_branch
        %331 = sbr.rel (%p329) target = $region40
      $region39: #{bert_cls_forward.17} parent=35 // pred_region
        %p332 = scmp.lt.s32.totalorder %s19, 1
        %s333 = scalar_select %p332, %s19, 1
        %p334 = scmp.lt.s32.totalorder %s20, 0
        %s335 = scalar_select %p334, %s20, 0
        %s336 = sadd.s32 %s335, %s333
        %s337 = smul.addr %s336, 4
        %s338 = scalar_lea.vmem %s2, %s337
      $region40: #{bert_cls_forward.17} parent=35 // pred_fallthru
        _
    $region36: #{bert_cls_forward.17} parent=5 // pred_fallthru
      _
  $region6: #{bert_cls_forward.17} parent=0 // loop_footer
    %s12 = sadd.s32 1, %s8
  $region7: #{bert_cls_forward.17} parent=0 // loop_footer_branch
    %7 = sbr.rel target = $region3
  $region8: #{bert_cls_forward.17} parent=0 // loop_exit
    _

// kernel: bert_cls_forward.20
$region0: #{bert_cls_forward.20}
  #allocation0 [shape = 'u32[]', space=smem, size = 0x4, offset = 0x4, fixed_abs, tag = 'smem constant byte address 0x4 - core index']
  #allocation1 [shape = 'u32[72,128]{1,0:T(1,128)}', space=vmem, size = 0x9000, scoped, tag = 'internal scratch']
  %s0 = inlined_call_operand.vmem [shape: bf16[16,32], index: 0, kind: input, shape index: {}]
  %s1 = inlined_call_operand.vmem [shape: bf16[32,64], index: 1, kind: input, shape index: {}]
  %s2 = inlined_call_operand.vmem [shape: f32[1,64], index: 2, kind: input, shape index: {}]
  %s3 = inlined_call_operand.vmem [shape: bf16[16,64], index: 3, kind: output, shape index: {}]
  %s4 = sld [smem:[#allocation0]]
  $region22: #{bert_cls_forward.20} parent=0
    _
  %s6 = ssub.s32 1, %s4
  %s7 = scalar_select 0, %s6, %s4
  // Predicated region
  $region2: #{bert_cls_forward.20} parent=0 // pred_check
    _
  $region3: #{bert_cls_forward.20} parent=0 // pred_check_branch
    %9 = sbr.rel (0) target = $region5
  $region4: #{bert_cls_forward.20} parent=0 // pred_region
    _
  $region5: #{bert_cls_forward.20} parent=0 // pred_fallthru
    _
  // Predicated region
  $region6: #{bert_cls_forward.20} parent=0 // pred_check
    _
  $region7: #{bert_cls_forward.20} parent=0 // pred_check_branch
    %11 = sbr.rel (0) target = $region9
  $region8: #{bert_cls_forward.20} parent=0 // pred_region
    _
  $region9: #{bert_cls_forward.20} parent=0 // pred_fallthru
    _
  // Predicated region
  $region10: #{bert_cls_forward.20} parent=0 // pred_check
    _
  $region11: #{bert_cls_forward.20} parent=0 // pred_check_branch
    %13 = sbr.rel (0) target = $region13
  $region12: #{bert_cls_forward.20} parent=0 // pred_region
    _
  $region13: #{bert_cls_forward.20} parent=0 // pred_fallthru
    _
  %v15 = vld [vmem:[%s0] sm:$0xf]
  %v16 = vld [vmem:[%s0 + $0x4] sm:$0xf]
  %v17 = vld [vmem:[%s1] sm:$0xf]
  %v18 = vld [vmem:[%s1 + $0x4] sm:$0xf]
  %v19 = vld [vmem:[%s1 + $0x8] sm:$0xf]
  %v20 = vld [vmem:[%s1 + $0xc] sm:$0xf]
  %v21 = vld [vmem:[%s2] sm:$0x1]
  %v23 = vperm.slane %v21, 0
  %v27 = vunpack.c.l.b16 %v15
  %v28 = vunpack.c.l.b16 %v16
  %v29 = vpack.c.b16 %v28, %v27
  %v34 = vunpack.c.l.b16 %v17
  %v35 = vunpack.c.l.b16 %v18
  %v36 = vunpack.c.l.b16 %v19
  %v37 = vunpack.c.l.b16 %v20
  %v38 = vpack.c.b16 %v35, %v34
  %v39 = vpack.c.b16 %v37, %v36
  %vm42 = vcmask 261120
  %v44 = vsel %vm42, %v29, 0
  %46 = vmatpush.bf16.msra.mxu0 0
  %47 = vmatpush.bf16.msra.mxu0 0
  %48 = vmatpush.bf16.msra.mxu0 0
  %49 = vmatpush.bf16.msra.mxu0 0
  %50 = vmatpush.bf16.msra.mxu0 0
  %51 = vmatpush.bf16.msra.mxu0 0
  %52 = vmatpush.bf16.msra.mxu0 %v39
  %53 = vmatpush.bf16.msra.mxu0 %v38
  %54 = vmatmul.bf16.gmra.mxu0 %v44
  %v55 = vpop.f32.mrf.mxu0
  %v56 = vadd.f32 %v23, %v55
  %v57 = vpop.f32.mrf.mxu0
  %v58 = vadd.f32 %v23, %v57
  %59 = vdwg.mxu0
  %v60 = vmul.f32 %v56, %v56
  %v61 = vmul.f32 %v58, %v58
  %v62 = vmul.f32 %v56, %v60
  %v63 = vmul.f32 %v58, %v61
  %v64 = vmul.f32 %v62, 0.044715
  %v65 = vmul.f32 %v63, 0.044715
  %v66 = vadd.f32 %v56, %v64
  %v67 = vadd.f32 %v58, %v65
  %v68 = vmul.f32 %v66, 0.7978846
  %v69 = vmul.f32 %v67, 0.7978846
  %v70 = vtanh.pop %v68
  %v71 = vtanh.pop %v69
  %v72 = vadd.f32 %v70, 1.0
  %v73 = vadd.f32 %v71, 1.0
  %v74 = vmul.f32 %v72, 0.5
  %v75 = vmul.f32 %v73, 0.5
  %v76 = vmul.f32 %v56, %v74
  %v77 = vmul.f32 %v58, %v75
  %v78 = vpack.c.bf16 %v76, %v76
  %v79 = vpack.c.bf16 %v77, %v77
  %vm80 = vcmask 519168
  %81 = vst.msk [vmem:[%s3] sm:$0xf] %vm80, %v78
  %82 = vst.msk [vmem:[%s3 + $0x4] sm:$0xf] %vm80, %v79
  // Predicated region
  $region14: #{bert_cls_forward.20} parent=0 // pred_check
    _
  $region15: #{bert_cls_forward.20} parent=0 // pred_check_branch
    %84 = sbr.rel (0) target = $region17
  $region16: #{bert_cls_forward.20} parent=0 // pred_region
    _
  $region17: #{bert_cls_forward.20} parent=0 // pred_fallthru
    _
  // Predicated region
  $region18: #{bert_cls_forward.20} parent=0 // pred_check
    _
  $region19: #{bert_cls_forward.20} parent=0 // pred_check_branch
    %86 = sbr.rel (0) target = $region21
  $region20: #{bert_cls_forward.20} parent=0 // pred_region
    _
  $region21: #{bert_cls_forward.20} parent=0 // pred_fallthru
    _

// kernel: bert_cls_forward.19
$region0: #{bert_cls_forward.19}
  #allocation0 [shape = 'u32[]', space=smem, size = 0x4, offset = 0x4, fixed_abs, tag = 'smem constant byte address 0x4 - core index']
  #allocation1 [shape = 'u32[72,128]{1,0:T(1,128)}', space=vmem, size = 0x9000, scoped, tag = 'internal scratch']
  %s0 = inlined_call_operand.vmem [shape: bf16[16,32], index: 0, kind: input, shape index: {}]
  %s1 = inlined_call_operand.vmem [shape: bf16[16,32], index: 1, kind: input, shape index: {}]
  %s2 = inlined_call_operand.vmem [shape: f32[1,32], index: 2, kind: input, shape index: {}]
  %s3 = inlined_call_operand.vmem [shape: f32[1,32], index: 3, kind: input, shape index: {}]
  %s4 = inlined_call_operand.vmem [shape: bf16[16,32], index: 4, kind: output, shape index: {}]
  %s5 = sld [smem:[#allocation0]]
  $region26: #{bert_cls_forward.19} parent=0
    _
  %s7 = ssub.s32 1, %s5
  %s8 = scalar_select 0, %s7, %s5
  // Predicated region
  $region2: #{bert_cls_forward.19} parent=0 // pred_check
    _
  $region3: #{bert_cls_forward.19} parent=0 // pred_check_branch
    %10 = sbr.rel (0) target = $region5
  $region4: #{bert_cls_forward.19} parent=0 // pred_region
    _
  $region5: #{bert_cls_forward.19} parent=0 // pred_fallthru
    _
  // Predicated region
  $region6: #{bert_cls_forward.19} parent=0 // pred_check
    _
  $region7: #{bert_cls_forward.19} parent=0 // pred_check_branch
    %12 = sbr.rel (0) target = $region9
  $region8: #{bert_cls_forward.19} parent=0 // pred_region
    _
  $region9: #{bert_cls_forward.19} parent=0 // pred_fallthru
    _
  // Predicated region
  $region10: #{bert_cls_forward.19} parent=0 // pred_check
    _
  $region11: #{bert_cls_forward.19} parent=0 // pred_check_branch
    %14 = sbr.rel (0) target = $region13
  $region12: #{bert_cls_forward.19} parent=0 // pred_region
    _
  $region13: #{bert_cls_forward.19} parent=0 // pred_fallthru
    _
  // Predicated region
  $region14: #{bert_cls_forward.19} parent=0 // pred_check
    _
  $region15: #{bert_cls_forward.19} parent=0 // pred_check_branch
    %16 = sbr.rel (0) target = $region17
  $region16: #{bert_cls_forward.19} parent=0 // pred_region
    _
  $region17: #{bert_cls_forward.19} parent=0 // pred_fallthru
    _
  %v17 = vld [vmem:[%s0] sm:$0xf]
  %v18 = vld [vmem:[%s0 + $0x4] sm:$0xf]
  %v19 = vunpack.c.l.bf16 %v17
  %v20 = vunpack.c.l.bf16 %v18
  %v21 = vld [vmem:[%s1] sm:$0xf]
  %v22 = vld [vmem:[%s1 + $0x4] sm:$0xf]
  %v23 = vunpack.c.l.bf16 %v21
  %v24 = vunpack.c.l.bf16 %v22
  %v25 = vadd.f32 %v19, %v23
  %v26 = vadd.f32 %v20, %v24
  %vm27 = vcmask 261120
  %v28 = vsel %vm27, %v25, 0.0
  %29 = vadd.xlane.f32.xlu0 %v28
  %v30 = vpop.xlane.xlu0 %29
  %v31 = vsel %vm27, %v26, 0.0
  %32 = vadd.xlane.f32.xlu0 %v31
  %v33 = vpop.xlane.xlu0 %32
  %v34 = vrcp.pop 32.0
  %v35 = vmul.f32 32.0, %v34
  %v36 = vsub.f32 1.0, %v35
  %v37 = vmul.f32 %v34, %v36
  %v38 = vadd.f32 %v34, %v37
  %vm39 = vweird.f32 %v34
  %v40 = vsel %vm39, %v34, %v38
  %v41 = vmul.f32 %v30, %v40
  %v42 = vmul.f32 %v33, %v40
  %v43 = vsub.f32 %v25, %v41
  %v44 = vsub.f32 %v26, %v42
  %v45 = vmul.f32 %v43, %v43
  %v46 = vmul.f32 %v44, %v44
  %v47 = vsel %vm27, %v45, 0.0
  %48 = vadd.xlane.f32.xlu0 %v47
  %v49 = vpop.xlane.xlu0 %48
  %v50 = vsel %vm27, %v46, 0.0
  %51 = vadd.xlane.f32.xlu0 %v50
  %v52 = vpop.xlane.xlu0 %51
  %v53 = vmul.f32 %v49, %v40
  %v54 = vmul.f32 %v52, %v40
  %v55 = vadd.f32 %v53, 1e-12
  %v56 = vadd.f32 %v54, 1e-12
  %v57 = vrsqrt.pop %v55
  %v58 = vmul.f32 %v57, %v55
  %v59 = vmul.f32 %v58, %v57
  %v60 = vmul.f32 0.5, %v59
  %v61 = vsub.f32 1.5, %v60
  %v62 = vmul.f32 %v57, %v61
  %vm63 = vweird.f32 %v55
  %vm64 = vweird.f32 %v57
  %vm65 = vmor %vm63, %vm64
  %v66 = vsel %vm65, %v57, %v62
  %v67 = vrsqrt.pop %v56
  %v68 = vmul.f32 %v67, %v56
  %v69 = vmul.f32 %v68, %v67
  %v70 = vmul.f32 0.5, %v69
  %v71 = vsub.f32 1.5, %v70
  %v72 = vmul.f32 %v67, %v71
  %vm73 = vweird.f32 %v56
  %vm74 = vweird.f32 %v67
  %vm75 = vmor %vm73, %vm74
  %v76 = vsel %vm75, %v67, %v72
  %v77 = vmul.f32 %v43, %v66
  %v78 = vmul.f32 %v44, %v76
  %v79 = vld [vmem:[%s2] sm:$0x1]
  %v81 = vperm.slane %v79, 0
  %v83 = vmul.f32 %v77, %v81
  %v84 = vmul.f32 %v78, %v81
  %v85 = vld [vmem:[%s3] sm:$0x1]
  %v87 = vperm.slane %v85, 0
  %v89 = vadd.f32 %v83, %v87
  %v90 = vadd.f32 %v84, %v87
  %v91 = vpack.c.bf16 %v89, %v89
  %v92 = vpack.c.bf16 %v90, %v90
  %vm93 = vcmask 257024
  %94 = vst.msk [vmem:[%s4] sm:$0xf] %vm93, %v91
  %95 = vst.msk [vmem:[%s4 + $0x4] sm:$0xf] %vm93, %v92
  // Predicated region
  $region18: #{bert_cls_forward.19} parent=0 // pred_check
    _
  $region19: #{bert_cls_forward.19} parent=0 // pred_check_branch
    %97 = sbr.rel (0) target = $region21
  $region20: #{bert_cls_forward.19} parent=0 // pred_region
    _
  $region21: #{bert_cls_forward.19} parent=0 // pred_fallthru
    _
  // Predicated region
  $region22: #{bert_cls_forward.19} parent=0 // pred_check
    _
  $region23: #{bert_cls_forward.19} parent=0 // pred_check_branch
    %99 = sbr.rel (0) target = $region25
  $region24: #{bert_cls_forward.19} parent=0 // pred_region
    _
  $region25: #{bert_cls_forward.19} parent=0 // pred_fallthru
    _

// kernel: bert_cls_forward.21
$region0: #{bert_cls_forward.21}
  #allocation0 [shape = 'u32[]', space=smem, size = 0x4, offset = 0x4, fixed_abs, tag = 'smem constant byte address 0x4 - core index']
  #allocation1 [shape = 'u32[72,128]{1,0:T(1,128)}', space=vmem, size = 0x9000, scoped, tag = 'internal scratch']
  %s0 = inlined_call_operand.vmem [shape: bf16[16,64], index: 0, kind: input, shape index: {}]
  %s1 = inlined_call_operand.vmem [shape: bf16[64,32], index: 1, kind: input, shape index: {}]
  %s2 = inlined_call_operand.vmem [shape: f32[1,32], index: 2, kind: input, shape index: {}]
  %s3 = inlined_call_operand.vmem [shape: bf16[16,32], index: 3, kind: output, shape index: {}]
  %s4 = sld [smem:[#allocation0]]
  $region22: #{bert_cls_forward.21} parent=0
    _
  %s6 = ssub.s32 1, %s4
  %s7 = scalar_select 0, %s6, %s4
  // Predicated region
  $region2: #{bert_cls_forward.21} parent=0 // pred_check
    _
  $region3: #{bert_cls_forward.21} parent=0 // pred_check_branch
    %9 = sbr.rel (0) target = $region5
  $region4: #{bert_cls_forward.21} parent=0 // pred_region
    _
  $region5: #{bert_cls_forward.21} parent=0 // pred_fallthru
    _
  // Predicated region
  $region6: #{bert_cls_forward.21} parent=0 // pred_check
    _
  $region7: #{bert_cls_forward.21} parent=0 // pred_check_branch
    %11 = sbr.rel (0) target = $region9
  $region8: #{bert_cls_forward.21} parent=0 // pred_region
    _
  $region9: #{bert_cls_forward.21} parent=0 // pred_fallthru
    _
  // Predicated region
  $region10: #{bert_cls_forward.21} parent=0 // pred_check
    _
  $region11: #{bert_cls_forward.21} parent=0 // pred_check_branch
    %13 = sbr.rel (0) target = $region13
  $region12: #{bert_cls_forward.21} parent=0 // pred_region
    _
  $region13: #{bert_cls_forward.21} parent=0 // pred_fallthru
    _
  %v15 = vld [vmem:[%s0] sm:$0xf]
  %v16 = vld [vmem:[%s0 + $0x4] sm:$0xf]
  %v17 = vld [vmem:[%s1] sm:$0xf]
  %v18 = vld [vmem:[%s1 + $0x4] sm:$0xf]
  %v19 = vld [vmem:[%s1 + $0x8] sm:$0xf]
  %v20 = vld [vmem:[%s1 + $0xc] sm:$0xf]
  %v21 = vld [vmem:[%s1 + $0x10] sm:$0xf]
  %v22 = vld [vmem:[%s1 + $0x14] sm:$0xf]
  %v23 = vld [vmem:[%s1 + $0x18] sm:$0xf]
  %v24 = vld [vmem:[%s1 + $0x1c] sm:$0xf]
  %v25 = vld [vmem:[%s2] sm:$0x1]
  %v27 = vperm.slane %v25, 0
  %v31 = vunpack.c.l.b16 %v15
  %v32 = vunpack.c.l.b16 %v16
  %v33 = vpack.c.b16 %v32, %v31
  %v42 = vunpack.c.l.b16 %v17
  %v43 = vunpack.c.l.b16 %v18
  %v44 = vunpack.c.l.b16 %v19
  %v45 = vunpack.c.l.b16 %v20
  %v46 = vunpack.c.l.b16 %v21
  %v47 = vunpack.c.l.b16 %v22
  %v48 = vunpack.c.l.b16 %v23
  %v49 = vunpack.c.l.b16 %v24
  %v50 = vpack.c.b16 %v43, %v42
  %v51 = vpack.c.b16 %v45, %v44
  %v52 = vpack.c.b16 %v47, %v46
  %v53 = vpack.c.b16 %v49, %v48
  %vm58 = vcmask 523264
  %v60 = vsel %vm58, %v33, 0
  %62 = vmatpush.bf16.msra.mxu0 0
  %63 = vmatpush.bf16.msra.mxu0 0
  %64 = vmatpush.bf16.msra.mxu0 0
  %65 = vmatpush.bf16.msra.mxu0 0
  %66 = vmatpush.bf16.msra.mxu0 %v53
  %67 = vmatpush.bf16.msra.mxu0 %v52
  %68 = vmatpush.bf16.msra.mxu0 %v51
  %69 = vmatpush.bf16.msra.mxu0 %v50
  %70 = vmatmul.bf16.gmra.mxu0 %v60
  %v71 = vpop.f32.mrf.mxu0
  %v72 = vadd.f32 %v27, %v71
  %v73 = vpop.f32.mrf.mxu0
  %v74 = vadd.f32 %v27, %v73
  %75 = vdwg.mxu0
  %v76 = vpack.c.bf16 %v72, %v72
  %v77 = vpack.c.bf16 %v74, %v74
  %vm78 = vcmask 257024
  %79 = vst.msk [vmem:[%s3] sm:$0xf] %vm78, %v76
  %80 = vst.msk [vmem:[%s3 + $0x4] sm:$0xf] %vm78, %v77
  // Predicated region
  $region14: #{bert_cls_forward.21} parent=0 // pred_check
    _
  $region15: #{bert_cls_forward.21} parent=0 // pred_check_branch
    %82 = sbr.rel (0) target = $region17
  $region16: #{bert_cls_forward.21} parent=0 // pred_region
    _
  $region17: #{bert_cls_forward.21} parent=0 // pred_fallthru
    _
  // Predicated region
  $region18: #{bert_cls_forward.21} parent=0 // pred_check
    _
  $region19: #{bert_cls_forward.21} parent=0 // pred_check_branch
    %84 = sbr.rel (0) target = $region21
  $region20: #{bert_cls_forward.21} parent=0 // pred_region
    _
  $region21: #{bert_cls_forward.21} parent=0 // pred_fallthru
    _

</llo_original>
